<compile_context>
chip_gen: v7x
topology: tpu7x:2x2x1
jax: 0.10.0
libtpu: 0.0.40
codegen_flags: <defaults>
</compile_context>

<pallas_src>
import functools

import jax
import jax.numpy as jnp
import numpy as np
from jax.experimental import pallas as pl
from jax.experimental.pallas import tpu as pltpu


# ----------------------------------------------------------------------------------
# Fused forward kernel: encoder MLP -> 2-layer LSTM (last step) -> output MLP.
# Row layout: encoder rows are in (b, s, n) order; LSTM batch rows in (b, n) order.
# ----------------------------------------------------------------------------------
def _fused_kernel(x_ref, ew1_ref, eb1_ref, ew2_ref, eb2_ref,
                  wih1_ref, whh1_ref, lb1_ref, wih2_ref, whh2_ref, lb2_ref,
                  ow1_ref, ob1_ref, ow2_ref, ob2_ref,
                  o_ref, *, B, S, N, D, H):
    f32 = jnp.float32

    # ---------------- frame encoder ----------------
    x = x_ref[...]                                   # (B*S*N, D) rows in (b, s, n) order
    ew1 = ew1_ref[...]                               # (D, H)
    # Layer 1: K=D (=3) contraction as D broadcast multiply-adds on the VPU.
    acc = x[:, 0:1] * ew1[0:1, :]
    for d in range(1, D):
        acc = acc + x[:, d:d + 1] * ew1[d:d + 1, :]
    h = jnp.maximum(acc + eb1_ref[...], 0.0)         # (B*S*N, H)
    # Layer 2 on the MXU (M = B*S*N fills the systolic array far better than per-step tiles).
    feat = jnp.maximum(
        jnp.dot(h, ew2_ref[...], preferred_element_type=f32) + eb2_ref[...], 0.0)

    # ---------------- 2-layer LSTM (PyTorch gate order i, f, g, o) ----------------
    # Precompute the layer-1 input projection for ALL timesteps as one batched matmul.
    xproj1 = (jnp.dot(feat, wih1_ref[...], preferred_element_type=f32)
              + lb1_ref[...])                        # (B*S*N, 4H), bias (bih1+bhh1) included

    whh1 = whh1_ref[...]                             # (H, 4H)
    # Fuse layer-2 input + recurrent weights -> one matmul per step.
    w2cat = jnp.concatenate([wih2_ref[...], whh2_ref[...]], axis=0)   # (2H, 4H)
    lb2 = lb2_ref[...]                               # (1, 4H)

    BN = B * N
    h1 = jnp.zeros((BN, H), f32)
    c1 = jnp.zeros((BN, H), f32)
    h2 = jnp.zeros((BN, H), f32)
    c2 = jnp.zeros((BN, H), f32)

    def sig(v):                                      # sigmoid(x) = 0.5*(tanh(0.5x)+1) -> EUP
        return 0.5 * jnp.tanh(0.5 * v) + 0.5

    def cell_update(g, c_prev):
        i_g = sig(g[:, 0:H])
        f_g = sig(g[:, H:2 * H])
        g_g = jnp.tanh(g[:, 2 * H:3 * H])
        o_g = sig(g[:, 3 * H:4 * H])
        c_new = f_g * c_prev + i_g * g_g
        h_new = o_g * jnp.tanh(c_new)
        return h_new, c_new

    # Whole recurrence in one kernel invocation; S is tiny so fully unroll the loop.
    for s in range(S):
        # Gather the (b, n)-ordered rows for timestep s from the (b, s, n)-ordered
        # projection: B contiguous, sublane-aligned static slices (no XLA transposes).
        xp_t = jnp.concatenate(
            [xproj1[b * S * N + s * N: b * S * N + (s + 1) * N, :] for b in range(B)],
            axis=0)                                  # (BN, 4H)
        g1 = xp_t + jnp.dot(h1, whh1, preferred_element_type=f32)
        h1, c1 = cell_update(g1, c1)
        g2 = (jnp.dot(jnp.concatenate([h1, h2], axis=-1), w2cat,
                      preferred_element_type=f32) + lb2)
        h2, c2 = cell_update(g2, c2)

    # ---------------- output MLP (last hidden state only) ----------------
    y = jnp.maximum(jnp.dot(h2, ow1_ref[...], preferred_element_type=f32) + ob1_ref[...], 0.0)
    out = jnp.dot(y, ow2_ref[...], preferred_element_type=f32) + ob2_ref[...]
    o_ref[...] = out.astype(o_ref.dtype)


# ----------------------------------------------------------------------------------
# Wrapper: single fused pallas_call; only free reshapes + the tiny final transpose
# remain in XLA.
# ----------------------------------------------------------------------------------
def point_mlp_nframes_forward(x, p, *, output_sequence_length, output_dim):
    if x.ndim == 3:
        x = x[None]
    B, S, N, D = x.shape
    H = p["enc_w1"].shape[1]
    Dout = output_dim * output_sequence_length

    vmem = pl.BlockSpec(memory_space=pltpu.MemorySpace.VMEM)
    kernel = functools.partial(_fused_kernel, B=B, S=S, N=N, D=D, H=H)

    # TODO(synk): for much larger B*N add a 'parallel' row-tile grid axis (v7x megacore),
    # switch the unrolled time loop to lax.fori_loop for large S, and cast MXU operands
    # to bf16 / re-check the VMEM budget if H is scaled to production sizes.
    last = pl.pallas_call(
        kernel,
        out_shape=jax.ShapeDtypeStruct((B * N, Dout), jnp.float32),
        in_specs=[vmem] * 15,
        out_specs=vmem,
    )(
        x.reshape(B * S * N, D),
        p["enc_w1"], p["enc_b1"].reshape(1, -1),
        p["enc_w2"], p["enc_b2"].reshape(1, -1),
        p["wih1"], p["whh1"], (p["bih1"] + p["bhh1"]).reshape(1, -1),
        p["wih2"], p["whh2"], (p["bih2"] + p["bhh2"]).reshape(1, -1),
        p["out_w1"], p["out_b1"].reshape(1, -1),
        p["out_w2"], p["out_b2"].reshape(1, -1),
    )

    out = last.reshape(B, N, output_sequence_length, output_dim).transpose(0, 2, 1, 3)
    return out[0] if B == 1 else out


# ----------------------------------------------------------------------------------
# Pure-JAX reference (mirrors the PyTorch module) for a correctness check.
# ----------------------------------------------------------------------------------
def point_mlp_nframes_reference(x, p, *, output_sequence_length, output_dim):
    if x.ndim == 3:
        x = x[None]
    B, S, N, D = x.shape
    h = x.reshape(B * S * N, D)
    h = jax.nn.relu(h @ p["enc_w1"] + p["enc_b1"])
    h = jax.nn.relu(h @ p["enc_w2"] + p["enc_b2"])
    H = h.shape[-1]
    h = h.reshape(B, S, N, H).transpose(0, 2, 1, 3).reshape(B * N, S, H)

    def lstm_layer(xs, wih, whh, b):
        BN = xs.shape[0]
        hh = jnp.zeros((BN, H), xs.dtype)
        cc = jnp.zeros((BN, H), xs.dtype)
        outs = []
        for t in range(xs.shape[1]):
            g = xs[:, t] @ wih + hh @ whh + b
            i_g = jax.nn.sigmoid(g[:, :H])
            f_g = jax.nn.sigmoid(g[:, H:2 * H])
            g_g = jnp.tanh(g[:, 2 * H:3 * H])
            o_g = jax.nn.sigmoid(g[:, 3 * H:])
            cc = f_g * cc + i_g * g_g
            hh = o_g * jnp.tanh(cc)
            outs.append(hh)
        return jnp.stack(outs, axis=1)

    y = lstm_layer(h, p["wih1"], p["whh1"], p["bih1"] + p["bhh1"])
    y = lstm_layer(y, p["wih2"], p["whh2"], p["bih2"] + p["bhh2"])
    last = y[:, -1]
    o = jax.nn.relu(last @ p["out_w1"] + p["out_b1"])
    o = o @ p["out_w2"] + p["out_b2"]
    o = o.reshape(B, N, output_sequence_length, output_dim).transpose(0, 2, 1, 3)
    return o[0] if B == 1 else o


def init_params(key, input_dim, hidden_dim, output_dim, output_sequence_length):
    def u(k, shape, fan_in):
        bound = 1.0 / np.sqrt(fan_in)
        return jax.random.uniform(k, shape, jnp.float32, -bound, bound)

    ks = jax.random.split(key, 16)
    H, D = hidden_dim, input_dim
    Dout = output_dim * output_sequence_length
    return {
        "enc_w1": u(ks[0], (D, H), D), "enc_b1": u(ks[1], (H,), D),
        "enc_w2": u(ks[2], (H, H), H), "enc_b2": u(ks[3], (H,), H),
        "wih1": u(ks[4], (H, 4 * H), H), "whh1": u(ks[5], (H, 4 * H), H),
        "bih1": u(ks[6], (4 * H,), H), "bhh1": u(ks[7], (4 * H,), H),
        "wih2": u(ks[8], (H, 4 * H), H), "whh2": u(ks[9], (H, 4 * H), H),
        "bih2": u(ks[10], (4 * H,), H), "bhh2": u(ks[11], (4 * H,), H),
        "out_w1": u(ks[12], (H, H), H), "out_b1": u(ks[13], (H,), H),
        "out_w2": u(ks[14], (H, Dout), H), "out_b2": u(ks[15], (Dout,), H),
    }


if __name__ == "__main__":
    # Small shapes consistent with the module: B=2, S=4 frames, N=16 points, D=3 coords,
    # hidden=32, output_dim=3, output_sequence_length=2.
    B, S, N, D = 2, 4, 16, 3
    H, OD, OS = 32, 3, 2

    root = jax.random.PRNGKey(0)
    k_param, k_x = jax.random.split(root)
    params = init_params(k_param, D, H, OD, OS)
    x = jax.random.normal(k_x, (B, S, N, D), dtype=jnp.float32)

    fwd = jax.jit(functools.partial(point_mlp_nframes_forward,
                                    output_sequence_length=OS, output_dim=OD))
    out = jax.block_until_ready(fwd(x, params))

    ref = point_mlp_nframes_reference(x, params, output_sequence_length=OS, output_dim=OD)
    assert out.shape == (B, OS, N, OD), out.shape
    np.testing.assert_allclose(np.asarray(out), np.asarray(ref), rtol=1e-3, atol=1e-3)

    print("KERNEL_OK")
</pallas_src>

<mosaic_0001>
module attributes {stable_mosaic.version = 11 : i64} {
  func.func @_fused_kernel(%arg0: memref<128x3xf32, #tpu.memory_space<vmem>>, %arg1: memref<3x32xf32, #tpu.memory_space<vmem>>, %arg2: memref<1x32xf32, #tpu.memory_space<vmem>>, %arg3: memref<32x32xf32, #tpu.memory_space<vmem>>, %arg4: memref<1x32xf32, #tpu.memory_space<vmem>>, %arg5: memref<32x128xf32, #tpu.memory_space<vmem>>, %arg6: memref<32x128xf32, #tpu.memory_space<vmem>>, %arg7: memref<1x128xf32, #tpu.memory_space<vmem>>, %arg8: memref<32x128xf32, #tpu.memory_space<vmem>>, %arg9: memref<32x128xf32, #tpu.memory_space<vmem>>, %arg10: memref<1x128xf32, #tpu.memory_space<vmem>>, %arg11: memref<32x32xf32, #tpu.memory_space<vmem>>, %arg12: memref<1x32xf32, #tpu.memory_space<vmem>>, %arg13: memref<32x6xf32, #tpu.memory_space<vmem>>, %arg14: memref<1x6xf32, #tpu.memory_space<vmem>>, %arg15: memref<32x6xf32, #tpu.memory_space<vmem>>) attributes {dimension_semantics = [], scalar_prefetch = 0 : i64, scratch_operands = 0 : i64, tpu.core_type = #tpu.core_type<tc>} {
    %c0 = arith.constant 0 : index
    %c0_0 = arith.constant 0 : index
    %0 = vector.load %arg0[%c0, %c0_0] : memref<128x3xf32, #tpu.memory_space<vmem>>, vector<128x3xf32>
    %c0_1 = arith.constant 0 : index
    %c0_2 = arith.constant 0 : index
    %1 = vector.load %arg1[%c0_1, %c0_2] : memref<3x32xf32, #tpu.memory_space<vmem>>, vector<3x32xf32>
    %2 = vector.extract_strided_slice %0 {offsets = [0, 0], sizes = [128, 1], strides = [1, 1]} : vector<128x3xf32> to vector<128x1xf32>
    %3 = vector.extract_strided_slice %1 {offsets = [0, 0], sizes = [1, 32], strides = [1, 1]} : vector<3x32xf32> to vector<1x32xf32>
    %4 = vector.broadcast %2 : vector<128x1xf32> to vector<128x32xf32>
    %5 = vector.broadcast %3 : vector<1x32xf32> to vector<128x32xf32>
    %6 = arith.mulf %4, %5 : vector<128x32xf32>
    %7 = vector.extract_strided_slice %0 {offsets = [0, 1], sizes = [128, 1], strides = [1, 1]} : vector<128x3xf32> to vector<128x1xf32>
    %8 = vector.extract_strided_slice %1 {offsets = [1, 0], sizes = [1, 32], strides = [1, 1]} : vector<3x32xf32> to vector<1x32xf32>
    %9 = vector.broadcast %7 : vector<128x1xf32> to vector<128x32xf32>
    %10 = vector.broadcast %8 : vector<1x32xf32> to vector<128x32xf32>
    %11 = arith.mulf %9, %10 : vector<128x32xf32>
    %12 = arith.addf %6, %11 : vector<128x32xf32>
    %13 = vector.extract_strided_slice %0 {offsets = [0, 2], sizes = [128, 1], strides = [1, 1]} : vector<128x3xf32> to vector<128x1xf32>
    %14 = vector.extract_strided_slice %1 {offsets = [2, 0], sizes = [1, 32], strides = [1, 1]} : vector<3x32xf32> to vector<1x32xf32>
    %15 = vector.broadcast %13 : vector<128x1xf32> to vector<128x32xf32>
    %16 = vector.broadcast %14 : vector<1x32xf32> to vector<128x32xf32>
    %17 = arith.mulf %15, %16 : vector<128x32xf32>
    %18 = arith.addf %12, %17 : vector<128x32xf32>
    %c0_3 = arith.constant 0 : index
    %c0_4 = arith.constant 0 : index
    %19 = vector.load %arg2[%c0_3, %c0_4] : memref<1x32xf32, #tpu.memory_space<vmem>>, vector<1x32xf32>
    %20 = vector.broadcast %19 : vector<1x32xf32> to vector<128x32xf32>
    %21 = arith.addf %18, %20 : vector<128x32xf32>
    %cst = arith.constant 0.000000e+00 : f32
    %22 = vector.broadcast %cst : f32 to vector<128x32xf32>
    %23 = arith.maximumf %21, %22 : vector<128x32xf32>
    %c0_5 = arith.constant 0 : index
    %c0_6 = arith.constant 0 : index
    %24 = vector.load %arg3[%c0_5, %c0_6] : memref<32x32xf32, #tpu.memory_space<vmem>>, vector<32x32xf32>
    %cst_7 = arith.constant dense<0.000000e+00> : vector<128x32xf32>
    %25 = tpu.matmul %23, %24, %cst_7 {dimension_numbers = #tpu.dot_dimension_numbers<[1], [0], [0], [1], [0, 0, 1, 1], [], []>} : vector<128x32xf32>, vector<32x32xf32>, vector<128x32xf32> -> vector<128x32xf32>
    %c0_8 = arith.constant 0 : index
    %c0_9 = arith.constant 0 : index
    %26 = vector.load %arg4[%c0_8, %c0_9] : memref<1x32xf32, #tpu.memory_space<vmem>>, vector<1x32xf32>
    %27 = vector.broadcast %26 : vector<1x32xf32> to vector<128x32xf32>
    %28 = arith.addf %25, %27 : vector<128x32xf32>
    %cst_10 = arith.constant 0.000000e+00 : f32
    %29 = vector.broadcast %cst_10 : f32 to vector<128x32xf32>
    %30 = arith.maximumf %28, %29 : vector<128x32xf32>
    %c0_11 = arith.constant 0 : index
    %c0_12 = arith.constant 0 : index
    %31 = vector.load %arg5[%c0_11, %c0_12] : memref<32x128xf32, #tpu.memory_space<vmem>>, vector<32x128xf32>
    %cst_13 = arith.constant dense<0.000000e+00> : vector<128x128xf32>
    %32 = tpu.matmul %30, %31, %cst_13 {dimension_numbers = #tpu.dot_dimension_numbers<[1], [0], [0], [1], [0, 0, 1, 1], [], []>} : vector<128x32xf32>, vector<32x128xf32>, vector<128x128xf32> -> vector<128x128xf32>
    %c0_14 = arith.constant 0 : index
    %c0_15 = arith.constant 0 : index
    %33 = vector.load %arg7[%c0_14, %c0_15] : memref<1x128xf32, #tpu.memory_space<vmem>>, vector<1x128xf32>
    %34 = vector.broadcast %33 : vector<1x128xf32> to vector<128x128xf32>
    %35 = arith.addf %32, %34 : vector<128x128xf32>
    %c0_16 = arith.constant 0 : index
    %c0_17 = arith.constant 0 : index
    %36 = vector.load %arg6[%c0_16, %c0_17] : memref<32x128xf32, #tpu.memory_space<vmem>>, vector<32x128xf32>
    %c0_18 = arith.constant 0 : index
    %c0_19 = arith.constant 0 : index
    %37 = vector.load %arg8[%c0_18, %c0_19] : memref<32x128xf32, #tpu.memory_space<vmem>>, vector<32x128xf32>
    %c0_20 = arith.constant 0 : index
    %c0_21 = arith.constant 0 : index
    %38 = vector.load %arg9[%c0_20, %c0_21] : memref<32x128xf32, #tpu.memory_space<vmem>>, vector<32x128xf32>
    %39 = tpu.concatenate %37, %38 in 0 : vector<32x128xf32>, vector<32x128xf32> -> vector<64x128xf32>
    %c0_22 = arith.constant 0 : index
    %c0_23 = arith.constant 0 : index
    %40 = vector.load %arg10[%c0_22, %c0_23] : memref<1x128xf32, #tpu.memory_space<vmem>>, vector<1x128xf32>
    %cst_24 = arith.constant 0.000000e+00 : f32
    %41 = vector.broadcast %cst_24 : f32 to vector<32x32xf32>
    %cst_25 = arith.constant 0.000000e+00 : f32
    %42 = vector.broadcast %cst_25 : f32 to vector<32x32xf32>
    %cst_26 = arith.constant 0.000000e+00 : f32
    %43 = vector.broadcast %cst_26 : f32 to vector<32x32xf32>
    %cst_27 = arith.constant 0.000000e+00 : f32
    %44 = vector.broadcast %cst_27 : f32 to vector<32x32xf32>
    %45 = vector.extract_strided_slice %35 {offsets = [0, 0], sizes = [16, 128], strides = [1, 1]} : vector<128x128xf32> to vector<16x128xf32>
    %46 = vector.extract_strided_slice %35 {offsets = [64, 0], sizes = [16, 128], strides = [1, 1]} : vector<128x128xf32> to vector<16x128xf32>
    %47 = tpu.concatenate %45, %46 in 0 : vector<16x128xf32>, vector<16x128xf32> -> vector<32x128xf32>
    %cst_28 = arith.constant dense<0.000000e+00> : vector<32x128xf32>
    %48 = tpu.matmul %41, %36, %cst_28 {dimension_numbers = #tpu.dot_dimension_numbers<[1], [0], [0], [1], [0, 0, 1, 1], [], []>} : vector<32x32xf32>, vector<32x128xf32>, vector<32x128xf32> -> vector<32x128xf32>
    %49 = arith.addf %47, %48 : vector<32x128xf32>
    %50 = vector.extract_strided_slice %49 {offsets = [0, 0], sizes = [32, 32], strides = [1, 1]} : vector<32x128xf32> to vector<32x32xf32>
    %cst_29 = arith.constant 5.000000e-01 : f32
    %51 = vector.broadcast %cst_29 : f32 to vector<32x32xf32>
    %52 = arith.mulf %51, %50 : vector<32x32xf32>
    %53 = math.tanh %52 : vector<32x32xf32>
    %cst_30 = arith.constant 5.000000e-01 : f32
    %54 = vector.broadcast %cst_30 : f32 to vector<32x32xf32>
    %55 = arith.mulf %54, %53 : vector<32x32xf32>
    %cst_31 = arith.constant 5.000000e-01 : f32
    %56 = vector.broadcast %cst_31 : f32 to vector<32x32xf32>
    %57 = arith.addf %55, %56 : vector<32x32xf32>
    %58 = vector.extract_strided_slice %49 {offsets = [0, 32], sizes = [32, 32], strides = [1, 1]} : vector<32x128xf32> to vector<32x32xf32>
    %cst_32 = arith.constant 5.000000e-01 : f32
    %59 = vector.broadcast %cst_32 : f32 to vector<32x32xf32>
    %60 = arith.mulf %59, %58 : vector<32x32xf32>
    %61 = math.tanh %60 : vector<32x32xf32>
    %cst_33 = arith.constant 5.000000e-01 : f32
    %62 = vector.broadcast %cst_33 : f32 to vector<32x32xf32>
    %63 = arith.mulf %62, %61 : vector<32x32xf32>
    %cst_34 = arith.constant 5.000000e-01 : f32
    %64 = vector.broadcast %cst_34 : f32 to vector<32x32xf32>
    %65 = arith.addf %63, %64 : vector<32x32xf32>
    %66 = vector.extract_strided_slice %49 {offsets = [0, 64], sizes = [32, 32], strides = [1, 1]} : vector<32x128xf32> to vector<32x32xf32>
    %67 = math.tanh %66 : vector<32x32xf32>
    %68 = vector.extract_strided_slice %49 {offsets = [0, 96], sizes = [32, 32], strides = [1, 1]} : vector<32x128xf32> to vector<32x32xf32>
    %cst_35 = arith.constant 5.000000e-01 : f32
    %69 = vector.broadcast %cst_35 : f32 to vector<32x32xf32>
    %70 = arith.mulf %69, %68 : vector<32x32xf32>
    %71 = math.tanh %70 : vector<32x32xf32>
    %cst_36 = arith.constant 5.000000e-01 : f32
    %72 = vector.broadcast %cst_36 : f32 to vector<32x32xf32>
    %73 = arith.mulf %72, %71 : vector<32x32xf32>
    %cst_37 = arith.constant 5.000000e-01 : f32
    %74 = vector.broadcast %cst_37 : f32 to vector<32x32xf32>
    %75 = arith.addf %73, %74 : vector<32x32xf32>
    %76 = arith.mulf %65, %42 : vector<32x32xf32>
    %77 = arith.mulf %57, %67 : vector<32x32xf32>
    %78 = arith.addf %76, %77 : vector<32x32xf32>
    %79 = math.tanh %78 : vector<32x32xf32>
    %80 = arith.mulf %75, %79 : vector<32x32xf32>
    %81 = tpu.concatenate %80, %43 in 1 : vector<32x32xf32>, vector<32x32xf32> -> vector<32x64xf32>
    %cst_38 = arith.constant dense<0.000000e+00> : vector<32x128xf32>
    %82 = tpu.matmul %81, %39, %cst_38 {dimension_numbers = #tpu.dot_dimension_numbers<[1], [0], [0], [1], [0, 0, 1, 1], [], []>} : vector<32x64xf32>, vector<64x128xf32>, vector<32x128xf32> -> vector<32x128xf32>
    %83 = vector.broadcast %40 : vector<1x128xf32> to vector<32x128xf32>
    %84 = arith.addf %82, %83 : vector<32x128xf32>
    %85 = vector.extract_strided_slice %84 {offsets = [0, 0], sizes = [32, 32], strides = [1, 1]} : vector<32x128xf32> to vector<32x32xf32>
    %cst_39 = arith.constant 5.000000e-01 : f32
    %86 = vector.broadcast %cst_39 : f32 to vector<32x32xf32>
    %87 = arith.mulf %86, %85 : vector<32x32xf32>
    %88 = math.tanh %87 : vector<32x32xf32>
    %cst_40 = arith.constant 5.000000e-01 : f32
    %89 = vector.broadcast %cst_40 : f32 to vector<32x32xf32>
    %90 = arith.mulf %89, %88 : vector<32x32xf32>
    %cst_41 = arith.constant 5.000000e-01 : f32
    %91 = vector.broadcast %cst_41 : f32 to vector<32x32xf32>
    %92 = arith.addf %90, %91 : vector<32x32xf32>
    %93 = vector.extract_strided_slice %84 {offsets = [0, 32], sizes = [32, 32], strides = [1, 1]} : vector<32x128xf32> to vector<32x32xf32>
    %cst_42 = arith.constant 5.000000e-01 : f32
    %94 = vector.broadcast %cst_42 : f32 to vector<32x32xf32>
    %95 = arith.mulf %94, %93 : vector<32x32xf32>
    %96 = math.tanh %95 : vector<32x32xf32>
    %cst_43 = arith.constant 5.000000e-01 : f32
    %97 = vector.broadcast %cst_43 : f32 to vector<32x32xf32>
    %98 = arith.mulf %97, %96 : vector<32x32xf32>
    %cst_44 = arith.constant 5.000000e-01 : f32
    %99 = vector.broadcast %cst_44 : f32 to vector<32x32xf32>
    %100 = arith.addf %98, %99 : vector<32x32xf32>
    %101 = vector.extract_strided_slice %84 {offsets = [0, 64], sizes = [32, 32], strides = [1, 1]} : vector<32x128xf32> to vector<32x32xf32>
    %102 = math.tanh %101 : vector<32x32xf32>
    %103 = vector.extract_strided_slice %84 {offsets = [0, 96], sizes = [32, 32], strides = [1, 1]} : vector<32x128xf32> to vector<32x32xf32>
    %cst_45 = arith.constant 5.000000e-01 : f32
    %104 = vector.broadcast %cst_45 : f32 to vector<32x32xf32>
    %105 = arith.mulf %104, %103 : vector<32x32xf32>
    %106 = math.tanh %105 : vector<32x32xf32>
    %cst_46 = arith.constant 5.000000e-01 : f32
    %107 = vector.broadcast %cst_46 : f32 to vector<32x32xf32>
    %108 = arith.mulf %107, %106 : vector<32x32xf32>
    %cst_47 = arith.constant 5.000000e-01 : f32
    %109 = vector.broadcast %cst_47 : f32 to vector<32x32xf32>
    %110 = arith.addf %108, %109 : vector<32x32xf32>
    %111 = arith.mulf %100, %44 : vector<32x32xf32>
    %112 = arith.mulf %92, %102 : vector<32x32xf32>
    %113 = arith.addf %111, %112 : vector<32x32xf32>
    %114 = math.tanh %113 : vector<32x32xf32>
    %115 = arith.mulf %110, %114 : vector<32x32xf32>
    %116 = vector.extract_strided_slice %35 {offsets = [16, 0], sizes = [16, 128], strides = [1, 1]} : vector<128x128xf32> to vector<16x128xf32>
    %117 = vector.extract_strided_slice %35 {offsets = [80, 0], sizes = [16, 128], strides = [1, 1]} : vector<128x128xf32> to vector<16x128xf32>
    %118 = tpu.concatenate %116, %117 in 0 : vector<16x128xf32>, vector<16x128xf32> -> vector<32x128xf32>
    %cst_48 = arith.constant dense<0.000000e+00> : vector<32x128xf32>
    %119 = tpu.matmul %80, %36, %cst_48 {dimension_numbers = #tpu.dot_dimension_numbers<[1], [0], [0], [1], [0, 0, 1, 1], [], []>} : vector<32x32xf32>, vector<32x128xf32>, vector<32x128xf32> -> vector<32x128xf32>
    %120 = arith.addf %118, %119 : vector<32x128xf32>
    %121 = vector.extract_strided_slice %120 {offsets = [0, 0], sizes = [32, 32], strides = [1, 1]} : vector<32x128xf32> to vector<32x32xf32>
    %cst_49 = arith.constant 5.000000e-01 : f32
    %122 = vector.broadcast %cst_49 : f32 to vector<32x32xf32>
    %123 = arith.mulf %122, %121 : vector<32x32xf32>
    %124 = math.tanh %123 : vector<32x32xf32>
    %cst_50 = arith.constant 5.000000e-01 : f32
    %125 = vector.broadcast %cst_50 : f32 to vector<32x32xf32>
    %126 = arith.mulf %125, %124 : vector<32x32xf32>
    %cst_51 = arith.constant 5.000000e-01 : f32
    %127 = vector.broadcast %cst_51 : f32 to vector<32x32xf32>
    %128 = arith.addf %126, %127 : vector<32x32xf32>
    %129 = vector.extract_strided_slice %120 {offsets = [0, 32], sizes = [32, 32], strides = [1, 1]} : vector<32x128xf32> to vector<32x32xf32>
    %cst_52 = arith.constant 5.000000e-01 : f32
    %130 = vector.broadcast %cst_52 : f32 to vector<32x32xf32>
    %131 = arith.mulf %130, %129 : vector<32x32xf32>
    %132 = math.tanh %131 : vector<32x32xf32>
    %cst_53 = arith.constant 5.000000e-01 : f32
    %133 = vector.broadcast %cst_53 : f32 to vector<32x32xf32>
    %134 = arith.mulf %133, %132 : vector<32x32xf32>
    %cst_54 = arith.constant 5.000000e-01 : f32
    %135 = vector.broadcast %cst_54 : f32 to vector<32x32xf32>
    %136 = arith.addf %134, %135 : vector<32x32xf32>
    %137 = vector.extract_strided_slice %120 {offsets = [0, 64], sizes = [32, 32], strides = [1, 1]} : vector<32x128xf32> to vector<32x32xf32>
    %138 = math.tanh %137 : vector<32x32xf32>
    %139 = vector.extract_strided_slice %120 {offsets = [0, 96], sizes = [32, 32], strides = [1, 1]} : vector<32x128xf32> to vector<32x32xf32>
    %cst_55 = arith.constant 5.000000e-01 : f32
    %140 = vector.broadcast %cst_55 : f32 to vector<32x32xf32>
    %141 = arith.mulf %140, %139 : vector<32x32xf32>
    %142 = math.tanh %141 : vector<32x32xf32>
    %cst_56 = arith.constant 5.000000e-01 : f32
    %143 = vector.broadcast %cst_56 : f32 to vector<32x32xf32>
    %144 = arith.mulf %143, %142 : vector<32x32xf32>
    %cst_57 = arith.constant 5.000000e-01 : f32
    %145 = vector.broadcast %cst_57 : f32 to vector<32x32xf32>
    %146 = arith.addf %144, %145 : vector<32x32xf32>
    %147 = arith.mulf %136, %78 : vector<32x32xf32>
    %148 = arith.mulf %128, %138 : vector<32x32xf32>
    %149 = arith.addf %147, %148 : vector<32x32xf32>
    %150 = math.tanh %149 : vector<32x32xf32>
    %151 = arith.mulf %146, %150 : vector<32x32xf32>
    %152 = tpu.concatenate %151, %115 in 1 : vector<32x32xf32>, vector<32x32xf32> -> vector<32x64xf32>
    %cst_58 = arith.constant dense<0.000000e+00> : vector<32x128xf32>
    %153 = tpu.matmul %152, %39, %cst_58 {dimension_numbers = #tpu.dot_dimension_numbers<[1], [0], [0], [1], [0, 0, 1, 1], [], []>} : vector<32x64xf32>, vector<64x128xf32>, vector<32x128xf32> -> vector<32x128xf32>
    %154 = vector.broadcast %40 : vector<1x128xf32> to vector<32x128xf32>
    %155 = arith.addf %153, %154 : vector<32x128xf32>
    %156 = vector.extract_strided_slice %155 {offsets = [0, 0], sizes = [32, 32], strides = [1, 1]} : vector<32x128xf32> to vector<32x32xf32>
    %cst_59 = arith.constant 5.000000e-01 : f32
    %157 = vector.broadcast %cst_59 : f32 to vector<32x32xf32>
    %158 = arith.mulf %157, %156 : vector<32x32xf32>
    %159 = math.tanh %158 : vector<32x32xf32>
    %cst_60 = arith.constant 5.000000e-01 : f32
    %160 = vector.broadcast %cst_60 : f32 to vector<32x32xf32>
    %161 = arith.mulf %160, %159 : vector<32x32xf32>
    %cst_61 = arith.constant 5.000000e-01 : f32
    %162 = vector.broadcast %cst_61 : f32 to vector<32x32xf32>
    %163 = arith.addf %161, %162 : vector<32x32xf32>
    %164 = vector.extract_strided_slice %155 {offsets = [0, 32], sizes = [32, 32], strides = [1, 1]} : vector<32x128xf32> to vector<32x32xf32>
    %cst_62 = arith.constant 5.000000e-01 : f32
    %165 = vector.broadcast %cst_62 : f32 to vector<32x32xf32>
    %166 = arith.mulf %165, %164 : vector<32x32xf32>
    %167 = math.tanh %166 : vector<32x32xf32>
    %cst_63 = arith.constant 5.000000e-01 : f32
    %168 = vector.broadcast %cst_63 : f32 to vector<32x32xf32>
    %169 = arith.mulf %168, %167 : vector<32x32xf32>
    %cst_64 = arith.constant 5.000000e-01 : f32
    %170 = vector.broadcast %cst_64 : f32 to vector<32x32xf32>
    %171 = arith.addf %169, %170 : vector<32x32xf32>
    %172 = vector.extract_strided_slice %155 {offsets = [0, 64], sizes = [32, 32], strides = [1, 1]} : vector<32x128xf32> to vector<32x32xf32>
    %173 = math.tanh %172 : vector<32x32xf32>
    %174 = vector.extract_strided_slice %155 {offsets = [0, 96], sizes = [32, 32], strides = [1, 1]} : vector<32x128xf32> to vector<32x32xf32>
    %cst_65 = arith.constant 5.000000e-01 : f32
    %175 = vector.broadcast %cst_65 : f32 to vector<32x32xf32>
    %176 = arith.mulf %175, %174 : vector<32x32xf32>
    %177 = math.tanh %176 : vector<32x32xf32>
    %cst_66 = arith.constant 5.000000e-01 : f32
    %178 = vector.broadcast %cst_66 : f32 to vector<32x32xf32>
    %179 = arith.mulf %178, %177 : vector<32x32xf32>
    %cst_67 = arith.constant 5.000000e-01 : f32
    %180 = vector.broadcast %cst_67 : f32 to vector<32x32xf32>
    %181 = arith.addf %179, %180 : vector<32x32xf32>
    %182 = arith.mulf %171, %113 : vector<32x32xf32>
    %183 = arith.mulf %163, %173 : vector<32x32xf32>
    %184 = arith.addf %182, %183 : vector<32x32xf32>
    %185 = math.tanh %184 : vector<32x32xf32>
    %186 = arith.mulf %181, %185 : vector<32x32xf32>
    %187 = vector.extract_strided_slice %35 {offsets = [32, 0], sizes = [16, 128], strides = [1, 1]} : vector<128x128xf32> to vector<16x128xf32>
    %188 = vector.extract_strided_slice %35 {offsets = [96, 0], sizes = [16, 128], strides = [1, 1]} : vector<128x128xf32> to vector<16x128xf32>
    %189 = tpu.concatenate %187, %188 in 0 : vector<16x128xf32>, vector<16x128xf32> -> vector<32x128xf32>
    %cst_68 = arith.constant dense<0.000000e+00> : vector<32x128xf32>
    %190 = tpu.matmul %151, %36, %cst_68 {dimension_numbers = #tpu.dot_dimension_numbers<[1], [0], [0], [1], [0, 0, 1, 1], [], []>} : vector<32x32xf32>, vector<32x128xf32>, vector<32x128xf32> -> vector<32x128xf32>
    %191 = arith.addf %189, %190 : vector<32x128xf32>
    %192 = vector.extract_strided_slice %191 {offsets = [0, 0], sizes = [32, 32], strides = [1, 1]} : vector<32x128xf32> to vector<32x32xf32>
    %cst_69 = arith.constant 5.000000e-01 : f32
    %193 = vector.broadcast %cst_69 : f32 to vector<32x32xf32>
    %194 = arith.mulf %193, %192 : vector<32x32xf32>
    %195 = math.tanh %194 : vector<32x32xf32>
    %cst_70 = arith.constant 5.000000e-01 : f32
    %196 = vector.broadcast %cst_70 : f32 to vector<32x32xf32>
    %197 = arith.mulf %196, %195 : vector<32x32xf32>
    %cst_71 = arith.constant 5.000000e-01 : f32
    %198 = vector.broadcast %cst_71 : f32 to vector<32x32xf32>
    %199 = arith.addf %197, %198 : vector<32x32xf32>
    %200 = vector.extract_strided_slice %191 {offsets = [0, 32], sizes = [32, 32], strides = [1, 1]} : vector<32x128xf32> to vector<32x32xf32>
    %cst_72 = arith.constant 5.000000e-01 : f32
    %201 = vector.broadcast %cst_72 : f32 to vector<32x32xf32>
    %202 = arith.mulf %201, %200 : vector<32x32xf32>
    %203 = math.tanh %202 : vector<32x32xf32>
    %cst_73 = arith.constant 5.000000e-01 : f32
    %204 = vector.broadcast %cst_73 : f32 to vector<32x32xf32>
    %205 = arith.mulf %204, %203 : vector<32x32xf32>
    %cst_74 = arith.constant 5.000000e-01 : f32
    %206 = vector.broadcast %cst_74 : f32 to vector<32x32xf32>
    %207 = arith.addf %205, %206 : vector<32x32xf32>
    %208 = vector.extract_strided_slice %191 {offsets = [0, 64], sizes = [32, 32], strides = [1, 1]} : vector<32x128xf32> to vector<32x32xf32>
    %209 = math.tanh %208 : vector<32x32xf32>
    %210 = vector.extract_strided_slice %191 {offsets = [0, 96], sizes = [32, 32], strides = [1, 1]} : vector<32x128xf32> to vector<32x32xf32>
    %cst_75 = arith.constant 5.000000e-01 : f32
    %211 = vector.broadcast %cst_75 : f32 to vector<32x32xf32>
    %212 = arith.mulf %211, %210 : vector<32x32xf32>
    %213 = math.tanh %212 : vector<32x32xf32>
    %cst_76 = arith.constant 5.000000e-01 : f32
    %214 = vector.broadcast %cst_76 : f32 to vector<32x32xf32>
    %215 = arith.mulf %214, %213 : vector<32x32xf32>
    %cst_77 = arith.constant 5.000000e-01 : f32
    %216 = vector.broadcast %cst_77 : f32 to vector<32x32xf32>
    %217 = arith.addf %215, %216 : vector<32x32xf32>
    %218 = arith.mulf %207, %149 : vector<32x32xf32>
    %219 = arith.mulf %199, %209 : vector<32x32xf32>
    %220 = arith.addf %218, %219 : vector<32x32xf32>
    %221 = math.tanh %220 : vector<32x32xf32>
    %222 = arith.mulf %217, %221 : vector<32x32xf32>
    %223 = tpu.concatenate %222, %186 in 1 : vector<32x32xf32>, vector<32x32xf32> -> vector<32x64xf32>
    %cst_78 = arith.constant dense<0.000000e+00> : vector<32x128xf32>
    %224 = tpu.matmul %223, %39, %cst_78 {dimension_numbers = #tpu.dot_dimension_numbers<[1], [0], [0], [1], [0, 0, 1, 1], [], []>} : vector<32x64xf32>, vector<64x128xf32>, vector<32x128xf32> -> vector<32x128xf32>
    %225 = vector.broadcast %40 : vector<1x128xf32> to vector<32x128xf32>
    %226 = arith.addf %224, %225 : vector<32x128xf32>
    %227 = vector.extract_strided_slice %226 {offsets = [0, 0], sizes = [32, 32], strides = [1, 1]} : vector<32x128xf32> to vector<32x32xf32>
    %cst_79 = arith.constant 5.000000e-01 : f32
    %228 = vector.broadcast %cst_79 : f32 to vector<32x32xf32>
    %229 = arith.mulf %228, %227 : vector<32x32xf32>
    %230 = math.tanh %229 : vector<32x32xf32>
    %cst_80 = arith.constant 5.000000e-01 : f32
    %231 = vector.broadcast %cst_80 : f32 to vector<32x32xf32>
    %232 = arith.mulf %231, %230 : vector<32x32xf32>
    %cst_81 = arith.constant 5.000000e-01 : f32
    %233 = vector.broadcast %cst_81 : f32 to vector<32x32xf32>
    %234 = arith.addf %232, %233 : vector<32x32xf32>
    %235 = vector.extract_strided_slice %226 {offsets = [0, 32], sizes = [32, 32], strides = [1, 1]} : vector<32x128xf32> to vector<32x32xf32>
    %cst_82 = arith.constant 5.000000e-01 : f32
    %236 = vector.broadcast %cst_82 : f32 to vector<32x32xf32>
    %237 = arith.mulf %236, %235 : vector<32x32xf32>
    %238 = math.tanh %237 : vector<32x32xf32>
    %cst_83 = arith.constant 5.000000e-01 : f32
    %239 = vector.broadcast %cst_83 : f32 to vector<32x32xf32>
    %240 = arith.mulf %239, %238 : vector<32x32xf32>
    %cst_84 = arith.constant 5.000000e-01 : f32
    %241 = vector.broadcast %cst_84 : f32 to vector<32x32xf32>
    %242 = arith.addf %240, %241 : vector<32x32xf32>
    %243 = vector.extract_strided_slice %226 {offsets = [0, 64], sizes = [32, 32], strides = [1, 1]} : vector<32x128xf32> to vector<32x32xf32>
    %244 = math.tanh %243 : vector<32x32xf32>
    %245 = vector.extract_strided_slice %226 {offsets = [0, 96], sizes = [32, 32], strides = [1, 1]} : vector<32x128xf32> to vector<32x32xf32>
    %cst_85 = arith.constant 5.000000e-01 : f32
    %246 = vector.broadcast %cst_85 : f32 to vector<32x32xf32>
    %247 = arith.mulf %246, %245 : vector<32x32xf32>
    %248 = math.tanh %247 : vector<32x32xf32>
    %cst_86 = arith.constant 5.000000e-01 : f32
    %249 = vector.broadcast %cst_86 : f32 to vector<32x32xf32>
    %250 = arith.mulf %249, %248 : vector<32x32xf32>
    %cst_87 = arith.constant 5.000000e-01 : f32
    %251 = vector.broadcast %cst_87 : f32 to vector<32x32xf32>
    %252 = arith.addf %250, %251 : vector<32x32xf32>
    %253 = arith.mulf %242, %184 : vector<32x32xf32>
    %254 = arith.mulf %234, %244 : vector<32x32xf32>
    %255 = arith.addf %253, %254 : vector<32x32xf32>
    %256 = math.tanh %255 : vector<32x32xf32>
    %257 = arith.mulf %252, %256 : vector<32x32xf32>
    %258 = vector.extract_strided_slice %35 {offsets = [48, 0], sizes = [16, 128], strides = [1, 1]} : vector<128x128xf32> to vector<16x128xf32>
    %259 = vector.extract_strided_slice %35 {offsets = [112, 0], sizes = [16, 128], strides = [1, 1]} : vector<128x128xf32> to vector<16x128xf32>
    %260 = tpu.concatenate %258, %259 in 0 : vector<16x128xf32>, vector<16x128xf32> -> vector<32x128xf32>
    %cst_88 = arith.constant dense<0.000000e+00> : vector<32x128xf32>
    %261 = tpu.matmul %222, %36, %cst_88 {dimension_numbers = #tpu.dot_dimension_numbers<[1], [0], [0], [1], [0, 0, 1, 1], [], []>} : vector<32x32xf32>, vector<32x128xf32>, vector<32x128xf32> -> vector<32x128xf32>
    %262 = arith.addf %260, %261 : vector<32x128xf32>
    %263 = vector.extract_strided_slice %262 {offsets = [0, 0], sizes = [32, 32], strides = [1, 1]} : vector<32x128xf32> to vector<32x32xf32>
    %cst_89 = arith.constant 5.000000e-01 : f32
    %264 = vector.broadcast %cst_89 : f32 to vector<32x32xf32>
    %265 = arith.mulf %264, %263 : vector<32x32xf32>
    %266 = math.tanh %265 : vector<32x32xf32>
    %cst_90 = arith.constant 5.000000e-01 : f32
    %267 = vector.broadcast %cst_90 : f32 to vector<32x32xf32>
    %268 = arith.mulf %267, %266 : vector<32x32xf32>
    %cst_91 = arith.constant 5.000000e-01 : f32
    %269 = vector.broadcast %cst_91 : f32 to vector<32x32xf32>
    %270 = arith.addf %268, %269 : vector<32x32xf32>
    %271 = vector.extract_strided_slice %262 {offsets = [0, 32], sizes = [32, 32], strides = [1, 1]} : vector<32x128xf32> to vector<32x32xf32>
    %cst_92 = arith.constant 5.000000e-01 : f32
    %272 = vector.broadcast %cst_92 : f32 to vector<32x32xf32>
    %273 = arith.mulf %272, %271 : vector<32x32xf32>
    %274 = math.tanh %273 : vector<32x32xf32>
    %cst_93 = arith.constant 5.000000e-01 : f32
    %275 = vector.broadcast %cst_93 : f32 to vector<32x32xf32>
    %276 = arith.mulf %275, %274 : vector<32x32xf32>
    %cst_94 = arith.constant 5.000000e-01 : f32
    %277 = vector.broadcast %cst_94 : f32 to vector<32x32xf32>
    %278 = arith.addf %276, %277 : vector<32x32xf32>
    %279 = vector.extract_strided_slice %262 {offsets = [0, 64], sizes = [32, 32], strides = [1, 1]} : vector<32x128xf32> to vector<32x32xf32>
    %280 = math.tanh %279 : vector<32x32xf32>
    %281 = vector.extract_strided_slice %262 {offsets = [0, 96], sizes = [32, 32], strides = [1, 1]} : vector<32x128xf32> to vector<32x32xf32>
    %cst_95 = arith.constant 5.000000e-01 : f32
    %282 = vector.broadcast %cst_95 : f32 to vector<32x32xf32>
    %283 = arith.mulf %282, %281 : vector<32x32xf32>
    %284 = math.tanh %283 : vector<32x32xf32>
    %cst_96 = arith.constant 5.000000e-01 : f32
    %285 = vector.broadcast %cst_96 : f32 to vector<32x32xf32>
    %286 = arith.mulf %285, %284 : vector<32x32xf32>
    %cst_97 = arith.constant 5.000000e-01 : f32
    %287 = vector.broadcast %cst_97 : f32 to vector<32x32xf32>
    %288 = arith.addf %286, %287 : vector<32x32xf32>
    %289 = arith.mulf %278, %220 : vector<32x32xf32>
    %290 = arith.mulf %270, %280 : vector<32x32xf32>
    %291 = arith.addf %289, %290 : vector<32x32xf32>
    %292 = math.tanh %291 : vector<32x32xf32>
    %293 = arith.mulf %288, %292 : vector<32x32xf32>
    %294 = tpu.concatenate %293, %257 in 1 : vector<32x32xf32>, vector<32x32xf32> -> vector<32x64xf32>
    %cst_98 = arith.constant dense<0.000000e+00> : vector<32x128xf32>
    %295 = tpu.matmul %294, %39, %cst_98 {dimension_numbers = #tpu.dot_dimension_numbers<[1], [0], [0], [1], [0, 0, 1, 1], [], []>} : vector<32x64xf32>, vector<64x128xf32>, vector<32x128xf32> -> vector<32x128xf32>
    %296 = vector.broadcast %40 : vector<1x128xf32> to vector<32x128xf32>
    %297 = arith.addf %295, %296 : vector<32x128xf32>
    %298 = vector.extract_strided_slice %297 {offsets = [0, 0], sizes = [32, 32], strides = [1, 1]} : vector<32x128xf32> to vector<32x32xf32>
    %cst_99 = arith.constant 5.000000e-01 : f32
    %299 = vector.broadcast %cst_99 : f32 to vector<32x32xf32>
    %300 = arith.mulf %299, %298 : vector<32x32xf32>
    %301 = math.tanh %300 : vector<32x32xf32>
    %cst_100 = arith.constant 5.000000e-01 : f32
    %302 = vector.broadcast %cst_100 : f32 to vector<32x32xf32>
    %303 = arith.mulf %302, %301 : vector<32x32xf32>
    %cst_101 = arith.constant 5.000000e-01 : f32
    %304 = vector.broadcast %cst_101 : f32 to vector<32x32xf32>
    %305 = arith.addf %303, %304 : vector<32x32xf32>
    %306 = vector.extract_strided_slice %297 {offsets = [0, 32], sizes = [32, 32], strides = [1, 1]} : vector<32x128xf32> to vector<32x32xf32>
    %cst_102 = arith.constant 5.000000e-01 : f32
    %307 = vector.broadcast %cst_102 : f32 to vector<32x32xf32>
    %308 = arith.mulf %307, %306 : vector<32x32xf32>
    %309 = math.tanh %308 : vector<32x32xf32>
    %cst_103 = arith.constant 5.000000e-01 : f32
    %310 = vector.broadcast %cst_103 : f32 to vector<32x32xf32>
    %311 = arith.mulf %310, %309 : vector<32x32xf32>
    %cst_104 = arith.constant 5.000000e-01 : f32
    %312 = vector.broadcast %cst_104 : f32 to vector<32x32xf32>
    %313 = arith.addf %311, %312 : vector<32x32xf32>
    %314 = vector.extract_strided_slice %297 {offsets = [0, 64], sizes = [32, 32], strides = [1, 1]} : vector<32x128xf32> to vector<32x32xf32>
    %315 = math.tanh %314 : vector<32x32xf32>
    %316 = vector.extract_strided_slice %297 {offsets = [0, 96], sizes = [32, 32], strides = [1, 1]} : vector<32x128xf32> to vector<32x32xf32>
    %cst_105 = arith.constant 5.000000e-01 : f32
    %317 = vector.broadcast %cst_105 : f32 to vector<32x32xf32>
    %318 = arith.mulf %317, %316 : vector<32x32xf32>
    %319 = math.tanh %318 : vector<32x32xf32>
    %cst_106 = arith.constant 5.000000e-01 : f32
    %320 = vector.broadcast %cst_106 : f32 to vector<32x32xf32>
    %321 = arith.mulf %320, %319 : vector<32x32xf32>
    %cst_107 = arith.constant 5.000000e-01 : f32
    %322 = vector.broadcast %cst_107 : f32 to vector<32x32xf32>
    %323 = arith.addf %321, %322 : vector<32x32xf32>
    %324 = arith.mulf %313, %255 : vector<32x32xf32>
    %325 = arith.mulf %305, %315 : vector<32x32xf32>
    %326 = arith.addf %324, %325 : vector<32x32xf32>
    %327 = math.tanh %326 : vector<32x32xf32>
    %328 = arith.mulf %323, %327 : vector<32x32xf32>
    %c0_108 = arith.constant 0 : index
    %c0_109 = arith.constant 0 : index
    %329 = vector.load %arg11[%c0_108, %c0_109] : memref<32x32xf32, #tpu.memory_space<vmem>>, vector<32x32xf32>
    %cst_110 = arith.constant dense<0.000000e+00> : vector<32x32xf32>
    %330 = tpu.matmul %328, %329, %cst_110 {dimension_numbers = #tpu.dot_dimension_numbers<[1], [0], [0], [1], [0, 0, 1, 1], [], []>} : vector<32x32xf32>, vector<32x32xf32>, vector<32x32xf32> -> vector<32x32xf32>
    %c0_111 = arith.constant 0 : index
    %c0_112 = arith.constant 0 : index
    %331 = vector.load %arg12[%c0_111, %c0_112] : memref<1x32xf32, #tpu.memory_space<vmem>>, vector<1x32xf32>
    %332 = vector.broadcast %331 : vector<1x32xf32> to vector<32x32xf32>
    %333 = arith.addf %330, %332 : vector<32x32xf32>
    %cst_113 = arith.constant 0.000000e+00 : f32
    %334 = vector.broadcast %cst_113 : f32 to vector<32x32xf32>
    %335 = arith.maximumf %333, %334 : vector<32x32xf32>
    %c0_114 = arith.constant 0 : index
    %c0_115 = arith.constant 0 : index
    %336 = vector.load %arg13[%c0_114, %c0_115] : memref<32x6xf32, #tpu.memory_space<vmem>>, vector<32x6xf32>
    %cst_116 = arith.constant dense<0.000000e+00> : vector<32x6xf32>
    %337 = tpu.matmul %335, %336, %cst_116 {dimension_numbers = #tpu.dot_dimension_numbers<[1], [0], [0], [1], [0, 0, 1, 1], [], []>} : vector<32x32xf32>, vector<32x6xf32>, vector<32x6xf32> -> vector<32x6xf32>
    %c0_117 = arith.constant 0 : index
    %c0_118 = arith.constant 0 : index
    %338 = vector.load %arg14[%c0_117, %c0_118] : memref<1x6xf32, #tpu.memory_space<vmem>>, vector<1x6xf32>
    %339 = vector.broadcast %338 : vector<1x6xf32> to vector<32x6xf32>
    %340 = arith.addf %337, %339 : vector<32x6xf32>
    %c0_119 = arith.constant 0 : index
    %c0_120 = arith.constant 0 : index
    %341 = vector.load %arg15[%c0_119, %c0_120] : memref<32x6xf32, #tpu.memory_space<vmem>>, vector<32x6xf32>
    tpu.vector_store %arg15[%c0_119, %c0_120], %340 {strides = array<i32>} : memref<32x6xf32, #tpu.memory_space<vmem>>, vector<32x6xf32>,
    return
  }
}

</mosaic_0001>

<llo_original>
// kernel: point_mlp_nframes_forward.1
$region0: #{point_mlp_nframes_forward.1}
  #allocation0 [shape = 'u32[]', space=smem, size = 0x4, offset = 0x4, fixed_abs, tag = 'smem constant byte address 0x4 - core index']
  #allocation1 [shape = 'u32[144,128]{1,0:T(1,128)}', space=vmem, size = 0x12000, scoped, tag = 'internal scratch']
  %s0 = inlined_call_operand.vmem [shape: f32[128,3], index: 0, kind: input, shape index: {}]
  %s1 = inlined_call_operand.vmem [shape: f32[3,32], index: 1, kind: input, shape index: {}]
  %s2 = inlined_call_operand.vmem [shape: f32[1,32], index: 2, kind: input, shape index: {}]
  %s3 = inlined_call_operand.vmem [shape: f32[32,32], index: 3, kind: input, shape index: {}]
  %s4 = inlined_call_operand.vmem [shape: f32[1,32], index: 4, kind: input, shape index: {}]
  %s5 = inlined_call_operand.vmem [shape: f32[32,128], index: 5, kind: input, shape index: {}]
  %s6 = inlined_call_operand.vmem [shape: f32[32,128], index: 6, kind: input, shape index: {}]
  %s7 = inlined_call_operand.vmem [shape: f32[1,128], index: 7, kind: input, shape index: {}]
  %s8 = inlined_call_operand.vmem [shape: f32[32,128], index: 8, kind: input, shape index: {}]
  %s9 = inlined_call_operand.vmem [shape: f32[32,128], index: 9, kind: input, shape index: {}]
  %s10 = inlined_call_operand.vmem [shape: f32[1,128], index: 10, kind: input, shape index: {}]
  %s11 = inlined_call_operand.vmem [shape: f32[32,32], index: 11, kind: input, shape index: {}]
  %s12 = inlined_call_operand.vmem [shape: f32[1,32], index: 12, kind: input, shape index: {}]
  %s13 = inlined_call_operand.vmem [shape: f32[32,6], index: 13, kind: input, shape index: {}]
  %s14 = inlined_call_operand.vmem [shape: f32[1,6], index: 14, kind: input, shape index: {}]
  %s15 = inlined_call_operand.vmem [shape: f32[32,6], index: 15, kind: output, shape index: {}]
  %s16 = sld [smem:[#allocation0]]
  $region70: #{point_mlp_nframes_forward.1} parent=0
    _
  %s18 = ssub.s32 1, %s16
  %s19 = scalar_select 0, %s18, %s16
  // Predicated region
  $region2: #{point_mlp_nframes_forward.1} parent=0 // pred_check
    _
  $region3: #{point_mlp_nframes_forward.1} parent=0 // pred_check_branch
    %21 = sbr.rel (0) target = $region5
  $region4: #{point_mlp_nframes_forward.1} parent=0 // pred_region
    _
  $region5: #{point_mlp_nframes_forward.1} parent=0 // pred_fallthru
    _
  // Predicated region
  $region6: #{point_mlp_nframes_forward.1} parent=0 // pred_check
    _
  $region7: #{point_mlp_nframes_forward.1} parent=0 // pred_check_branch
    %23 = sbr.rel (0) target = $region9
  $region8: #{point_mlp_nframes_forward.1} parent=0 // pred_region
    _
  $region9: #{point_mlp_nframes_forward.1} parent=0 // pred_fallthru
    _
  // Predicated region
  $region10: #{point_mlp_nframes_forward.1} parent=0 // pred_check
    _
  $region11: #{point_mlp_nframes_forward.1} parent=0 // pred_check_branch
    %25 = sbr.rel (0) target = $region13
  $region12: #{point_mlp_nframes_forward.1} parent=0 // pred_region
    _
  $region13: #{point_mlp_nframes_forward.1} parent=0 // pred_fallthru
    _
  // Predicated region
  $region14: #{point_mlp_nframes_forward.1} parent=0 // pred_check
    _
  $region15: #{point_mlp_nframes_forward.1} parent=0 // pred_check_branch
    %27 = sbr.rel (0) target = $region17
  $region16: #{point_mlp_nframes_forward.1} parent=0 // pred_region
    _
  $region17: #{point_mlp_nframes_forward.1} parent=0 // pred_fallthru
    _
  // Predicated region
  $region18: #{point_mlp_nframes_forward.1} parent=0 // pred_check
    _
  $region19: #{point_mlp_nframes_forward.1} parent=0 // pred_check_branch
    %29 = sbr.rel (0) target = $region21
  $region20: #{point_mlp_nframes_forward.1} parent=0 // pred_region
    _
  $region21: #{point_mlp_nframes_forward.1} parent=0 // pred_fallthru
    _
  // Predicated region
  $region22: #{point_mlp_nframes_forward.1} parent=0 // pred_check
    _
  $region23: #{point_mlp_nframes_forward.1} parent=0 // pred_check_branch
    %31 = sbr.rel (0) target = $region25
  $region24: #{point_mlp_nframes_forward.1} parent=0 // pred_region
    _
  $region25: #{point_mlp_nframes_forward.1} parent=0 // pred_fallthru
    _
  // Predicated region
  $region26: #{point_mlp_nframes_forward.1} parent=0 // pred_check
    _
  $region27: #{point_mlp_nframes_forward.1} parent=0 // pred_check_branch
    %33 = sbr.rel (0) target = $region29
  $region28: #{point_mlp_nframes_forward.1} parent=0 // pred_region
    _
  $region29: #{point_mlp_nframes_forward.1} parent=0 // pred_fallthru
    _
  // Predicated region
  $region30: #{point_mlp_nframes_forward.1} parent=0 // pred_check
    _
  $region31: #{point_mlp_nframes_forward.1} parent=0 // pred_check_branch
    %35 = sbr.rel (0) target = $region33
  $region32: #{point_mlp_nframes_forward.1} parent=0 // pred_region
    _
  $region33: #{point_mlp_nframes_forward.1} parent=0 // pred_fallthru
    _
  // Predicated region
  $region34: #{point_mlp_nframes_forward.1} parent=0 // pred_check
    _
  $region35: #{point_mlp_nframes_forward.1} parent=0 // pred_check_branch
    %37 = sbr.rel (0) target = $region37
  $region36: #{point_mlp_nframes_forward.1} parent=0 // pred_region
    _
  $region37: #{point_mlp_nframes_forward.1} parent=0 // pred_fallthru
    _
  // Predicated region
  $region38: #{point_mlp_nframes_forward.1} parent=0 // pred_check
    _
  $region39: #{point_mlp_nframes_forward.1} parent=0 // pred_check_branch
    %39 = sbr.rel (0) target = $region41
  $region40: #{point_mlp_nframes_forward.1} parent=0 // pred_region
    _
  $region41: #{point_mlp_nframes_forward.1} parent=0 // pred_fallthru
    _
  // Predicated region
  $region42: #{point_mlp_nframes_forward.1} parent=0 // pred_check
    _
  $region43: #{point_mlp_nframes_forward.1} parent=0 // pred_check_branch
    %41 = sbr.rel (0) target = $region45
  $region44: #{point_mlp_nframes_forward.1} parent=0 // pred_region
    _
  $region45: #{point_mlp_nframes_forward.1} parent=0 // pred_fallthru
    _
  // Predicated region
  $region46: #{point_mlp_nframes_forward.1} parent=0 // pred_check
    _
  $region47: #{point_mlp_nframes_forward.1} parent=0 // pred_check_branch
    %43 = sbr.rel (0) target = $region49
  $region48: #{point_mlp_nframes_forward.1} parent=0 // pred_region
    _
  $region49: #{point_mlp_nframes_forward.1} parent=0 // pred_fallthru
    _
  // Predicated region
  $region50: #{point_mlp_nframes_forward.1} parent=0 // pred_check
    _
  $region51: #{point_mlp_nframes_forward.1} parent=0 // pred_check_branch
    %45 = sbr.rel (0) target = $region53
  $region52: #{point_mlp_nframes_forward.1} parent=0 // pred_region
    _
  $region53: #{point_mlp_nframes_forward.1} parent=0 // pred_fallthru
    _
  // Predicated region
  $region54: #{point_mlp_nframes_forward.1} parent=0 // pred_check
    _
  $region55: #{point_mlp_nframes_forward.1} parent=0 // pred_check_branch
    %47 = sbr.rel (0) target = $region57
  $region56: #{point_mlp_nframes_forward.1} parent=0 // pred_region
    _
  $region57: #{point_mlp_nframes_forward.1} parent=0 // pred_fallthru
    _
  // Predicated region
  $region58: #{point_mlp_nframes_forward.1} parent=0 // pred_check
    _
  $region59: #{point_mlp_nframes_forward.1} parent=0 // pred_check_branch
    %49 = sbr.rel (0) target = $region61
  $region60: #{point_mlp_nframes_forward.1} parent=0 // pred_region
    _
  $region61: #{point_mlp_nframes_forward.1} parent=0 // pred_fallthru
    _
  %v50 = vld [vmem:[%s0] sm:$0xff]
  %v51 = vld [vmem:[%s0 + $0x8] sm:$0xff]
  %v52 = vld [vmem:[%s0 + $0x10] sm:$0xff]
  %v53 = vld [vmem:[%s0 + $0x18] sm:$0xff]
  %v54 = vld [vmem:[%s0 + $0x20] sm:$0xff]
  %v55 = vld [vmem:[%s0 + $0x28] sm:$0xff]
  %v56 = vld [vmem:[%s0 + $0x30] sm:$0xff]
  %v57 = vld [vmem:[%s0 + $0x38] sm:$0xff]
  %v58 = vld [vmem:[%s0 + $0x40] sm:$0xff]
  %v59 = vld [vmem:[%s0 + $0x48] sm:$0xff]
  %v60 = vld [vmem:[%s0 + $0x50] sm:$0xff]
  %v61 = vld [vmem:[%s0 + $0x58] sm:$0xff]
  %v62 = vld [vmem:[%s0 + $0x60] sm:$0xff]
  %v63 = vld [vmem:[%s0 + $0x68] sm:$0xff]
  %v64 = vld [vmem:[%s0 + $0x70] sm:$0xff]
  %v65 = vld [vmem:[%s0 + $0x78] sm:$0xff]
  %v66 = vld [vmem:[%s1] sm:$0x7]
  %68 = vset.pattern.permute.xlu0 0
  %69 = vperm.xlu0 %68, %v50
  %v70 = vpop.permute.xlu0 %69
  %73 = vset.pattern.permute.xlu0 0
  %74 = vperm.xlu0 %73, %v51
  %v75 = vpop.permute.xlu0 %74
  %78 = vset.pattern.permute.xlu0 0
  %79 = vperm.xlu0 %78, %v52
  %v80 = vpop.permute.xlu0 %79
  %83 = vset.pattern.permute.xlu0 0
  %84 = vperm.xlu0 %83, %v53
  %v85 = vpop.permute.xlu0 %84
  %88 = vset.pattern.permute.xlu0 0
  %89 = vperm.xlu0 %88, %v54
  %v90 = vpop.permute.xlu0 %89
  %93 = vset.pattern.permute.xlu0 0
  %94 = vperm.xlu0 %93, %v55
  %v95 = vpop.permute.xlu0 %94
  %98 = vset.pattern.permute.xlu0 0
  %99 = vperm.xlu0 %98, %v56
  %v100 = vpop.permute.xlu0 %99
  %103 = vset.pattern.permute.xlu0 0
  %104 = vperm.xlu0 %103, %v57
  %v105 = vpop.permute.xlu0 %104
  %108 = vset.pattern.permute.xlu0 0
  %109 = vperm.xlu0 %108, %v58
  %v110 = vpop.permute.xlu0 %109
  %113 = vset.pattern.permute.xlu0 0
  %114 = vperm.xlu0 %113, %v59
  %v115 = vpop.permute.xlu0 %114
  %118 = vset.pattern.permute.xlu0 0
  %119 = vperm.xlu0 %118, %v60
  %v120 = vpop.permute.xlu0 %119
  %123 = vset.pattern.permute.xlu0 0
  %124 = vperm.xlu0 %123, %v61
  %v125 = vpop.permute.xlu0 %124
  %128 = vset.pattern.permute.xlu0 0
  %129 = vperm.xlu0 %128, %v62
  %v130 = vpop.permute.xlu0 %129
  %133 = vset.pattern.permute.xlu0 0
  %134 = vperm.xlu0 %133, %v63
  %v135 = vpop.permute.xlu0 %134
  %138 = vset.pattern.permute.xlu0 0
  %139 = vperm.xlu0 %138, %v64
  %v140 = vpop.permute.xlu0 %139
  %143 = vset.pattern.permute.xlu0 0
  %144 = vperm.xlu0 %143, %v65
  %v145 = vpop.permute.xlu0 %144
  %v147 = vlaneseq
  %v148 = vshrl.u32 %v147, 7
  %v149 = vsub.s32 0, %v148
  %v150 = vrot.slane %v66, %v149
  %v151 = vmul.f32 %v70, %v150
  %v152 = vmul.f32 %v75, %v150
  %v153 = vmul.f32 %v80, %v150
  %v154 = vmul.f32 %v85, %v150
  %v155 = vmul.f32 %v90, %v150
  %v156 = vmul.f32 %v95, %v150
  %v157 = vmul.f32 %v100, %v150
  %v158 = vmul.f32 %v105, %v150
  %v159 = vmul.f32 %v110, %v150
  %v160 = vmul.f32 %v115, %v150
  %v161 = vmul.f32 %v120, %v150
  %v162 = vmul.f32 %v125, %v150
  %v163 = vmul.f32 %v130, %v150
  %v164 = vmul.f32 %v135, %v150
  %v165 = vmul.f32 %v140, %v150
  %v166 = vmul.f32 %v145, %v150
  %167 = vset.pattern.permute.xlu0 1
  %168 = vperm.xlu0 %167, %v50
  %v169 = vpop.permute.xlu0 %168
  %171 = vset.pattern.permute.xlu0 1
  %172 = vperm.xlu0 %171, %v51
  %v173 = vpop.permute.xlu0 %172
  %175 = vset.pattern.permute.xlu0 1
  %176 = vperm.xlu0 %175, %v52
  %v177 = vpop.permute.xlu0 %176
  %179 = vset.pattern.permute.xlu0 1
  %180 = vperm.xlu0 %179, %v53
  %v181 = vpop.permute.xlu0 %180
  %183 = vset.pattern.permute.xlu0 1
  %184 = vperm.xlu0 %183, %v54
  %v185 = vpop.permute.xlu0 %184
  %187 = vset.pattern.permute.xlu0 1
  %188 = vperm.xlu0 %187, %v55
  %v189 = vpop.permute.xlu0 %188
  %191 = vset.pattern.permute.xlu0 1
  %192 = vperm.xlu0 %191, %v56
  %v193 = vpop.permute.xlu0 %192
  %195 = vset.pattern.permute.xlu0 1
  %196 = vperm.xlu0 %195, %v57
  %v197 = vpop.permute.xlu0 %196
  %199 = vset.pattern.permute.xlu0 1
  %200 = vperm.xlu0 %199, %v58
  %v201 = vpop.permute.xlu0 %200
  %203 = vset.pattern.permute.xlu0 1
  %204 = vperm.xlu0 %203, %v59
  %v205 = vpop.permute.xlu0 %204
  %207 = vset.pattern.permute.xlu0 1
  %208 = vperm.xlu0 %207, %v60
  %v209 = vpop.permute.xlu0 %208
  %211 = vset.pattern.permute.xlu0 1
  %212 = vperm.xlu0 %211, %v61
  %v213 = vpop.permute.xlu0 %212
  %215 = vset.pattern.permute.xlu0 1
  %216 = vperm.xlu0 %215, %v62
  %v217 = vpop.permute.xlu0 %216
  %219 = vset.pattern.permute.xlu0 1
  %220 = vperm.xlu0 %219, %v63
  %v221 = vpop.permute.xlu0 %220
  %223 = vset.pattern.permute.xlu0 1
  %224 = vperm.xlu0 %223, %v64
  %v225 = vpop.permute.xlu0 %224
  %227 = vset.pattern.permute.xlu0 1
  %228 = vperm.xlu0 %227, %v65
  %v229 = vpop.permute.xlu0 %228
  %v231 = vlaneseq
  %v232 = vshrl.u32 %v231, 7
  %v233 = vsub.s32 1, %v232
  %v234 = vrot.slane %v66, %v233
  %v235 = vmul.f32 %v169, %v234
  %v236 = vmul.f32 %v173, %v234
  %v237 = vmul.f32 %v177, %v234
  %v238 = vmul.f32 %v181, %v234
  %v239 = vmul.f32 %v185, %v234
  %v240 = vmul.f32 %v189, %v234
  %v241 = vmul.f32 %v193, %v234
  %v242 = vmul.f32 %v197, %v234
  %v243 = vmul.f32 %v201, %v234
  %v244 = vmul.f32 %v205, %v234
  %v245 = vmul.f32 %v209, %v234
  %v246 = vmul.f32 %v213, %v234
  %v247 = vmul.f32 %v217, %v234
  %v248 = vmul.f32 %v221, %v234
  %v249 = vmul.f32 %v225, %v234
  %v250 = vmul.f32 %v229, %v234
  %v251 = vadd.f32 %v151, %v235
  %v252 = vadd.f32 %v152, %v236
  %v253 = vadd.f32 %v153, %v237
  %v254 = vadd.f32 %v154, %v238
  %v255 = vadd.f32 %v155, %v239
  %v256 = vadd.f32 %v156, %v240
  %v257 = vadd.f32 %v157, %v241
  %v258 = vadd.f32 %v158, %v242
  %v259 = vadd.f32 %v159, %v243
  %v260 = vadd.f32 %v160, %v244
  %v261 = vadd.f32 %v161, %v245
  %v262 = vadd.f32 %v162, %v246
  %v263 = vadd.f32 %v163, %v247
  %v264 = vadd.f32 %v164, %v248
  %v265 = vadd.f32 %v165, %v249
  %v266 = vadd.f32 %v166, %v250
  %267 = vset.pattern.permute.xlu0 2
  %268 = vperm.xlu0 %267, %v50
  %v269 = vpop.permute.xlu0 %268
  %271 = vset.pattern.permute.xlu0 2
  %272 = vperm.xlu0 %271, %v51
  %v273 = vpop.permute.xlu0 %272
  %275 = vset.pattern.permute.xlu0 2
  %276 = vperm.xlu0 %275, %v52
  %v277 = vpop.permute.xlu0 %276
  %279 = vset.pattern.permute.xlu0 2
  %280 = vperm.xlu0 %279, %v53
  %v281 = vpop.permute.xlu0 %280
  %283 = vset.pattern.permute.xlu0 2
  %284 = vperm.xlu0 %283, %v54
  %v285 = vpop.permute.xlu0 %284
  %287 = vset.pattern.permute.xlu0 2
  %288 = vperm.xlu0 %287, %v55
  %v289 = vpop.permute.xlu0 %288
  %291 = vset.pattern.permute.xlu0 2
  %292 = vperm.xlu0 %291, %v56
  %v293 = vpop.permute.xlu0 %292
  %295 = vset.pattern.permute.xlu0 2
  %296 = vperm.xlu0 %295, %v57
  %v297 = vpop.permute.xlu0 %296
  %299 = vset.pattern.permute.xlu0 2
  %300 = vperm.xlu0 %299, %v58
  %v301 = vpop.permute.xlu0 %300
  %303 = vset.pattern.permute.xlu0 2
  %304 = vperm.xlu0 %303, %v59
  %v305 = vpop.permute.xlu0 %304
  %307 = vset.pattern.permute.xlu0 2
  %308 = vperm.xlu0 %307, %v60
  %v309 = vpop.permute.xlu0 %308
  %311 = vset.pattern.permute.xlu0 2
  %312 = vperm.xlu0 %311, %v61
  %v313 = vpop.permute.xlu0 %312
  %315 = vset.pattern.permute.xlu0 2
  %316 = vperm.xlu0 %315, %v62
  %v317 = vpop.permute.xlu0 %316
  %319 = vset.pattern.permute.xlu0 2
  %320 = vperm.xlu0 %319, %v63
  %v321 = vpop.permute.xlu0 %320
  %323 = vset.pattern.permute.xlu0 2
  %324 = vperm.xlu0 %323, %v64
  %v325 = vpop.permute.xlu0 %324
  %327 = vset.pattern.permute.xlu0 2
  %328 = vperm.xlu0 %327, %v65
  %v329 = vpop.permute.xlu0 %328
  %v331 = vlaneseq
  %v332 = vshrl.u32 %v331, 7
  %v333 = vsub.s32 2, %v332
  %v334 = vrot.slane %v66, %v333
  %v335 = vmul.f32 %v269, %v334
  %v336 = vmul.f32 %v273, %v334
  %v337 = vmul.f32 %v277, %v334
  %v338 = vmul.f32 %v281, %v334
  %v339 = vmul.f32 %v285, %v334
  %v340 = vmul.f32 %v289, %v334
  %v341 = vmul.f32 %v293, %v334
  %v342 = vmul.f32 %v297, %v334
  %v343 = vmul.f32 %v301, %v334
  %v344 = vmul.f32 %v305, %v334
  %v345 = vmul.f32 %v309, %v334
  %v346 = vmul.f32 %v313, %v334
  %v347 = vmul.f32 %v317, %v334
  %v348 = vmul.f32 %v321, %v334
  %v349 = vmul.f32 %v325, %v334
  %v350 = vmul.f32 %v329, %v334
  %v351 = vadd.f32 %v251, %v335
  %v352 = vadd.f32 %v252, %v336
  %v353 = vadd.f32 %v253, %v337
  %v354 = vadd.f32 %v254, %v338
  %v355 = vadd.f32 %v255, %v339
  %v356 = vadd.f32 %v256, %v340
  %v357 = vadd.f32 %v257, %v341
  %v358 = vadd.f32 %v258, %v342
  %v359 = vadd.f32 %v259, %v343
  %v360 = vadd.f32 %v260, %v344
  %v361 = vadd.f32 %v261, %v345
  %v362 = vadd.f32 %v262, %v346
  %v363 = vadd.f32 %v263, %v347
  %v364 = vadd.f32 %v264, %v348
  %v365 = vadd.f32 %v265, %v349
  %v366 = vadd.f32 %v266, %v350
  %v367 = vld [vmem:[%s2] sm:$0x1]
  %v369 = vlaneseq
  %v370 = vshrl.u32 %v369, 7
  %v371 = vsub.s32 0, %v370
  %v372 = vrot.slane %v367, %v371
  %v374 = vadd.f32 %v351, %v372
  %v375 = vadd.f32 %v352, %v372
  %v376 = vadd.f32 %v353, %v372
  %v377 = vadd.f32 %v354, %v372
  %v378 = vadd.f32 %v355, %v372
  %v379 = vadd.f32 %v356, %v372
  %v380 = vadd.f32 %v357, %v372
  %v381 = vadd.f32 %v358, %v372
  %v382 = vadd.f32 %v359, %v372
  %v383 = vadd.f32 %v360, %v372
  %v384 = vadd.f32 %v361, %v372
  %v385 = vadd.f32 %v362, %v372
  %v386 = vadd.f32 %v363, %v372
  %v387 = vadd.f32 %v364, %v372
  %v388 = vadd.f32 %v365, %v372
  %v389 = vadd.f32 %v366, %v372
  %v390 = vmax.f32 %v374, 0.0
  %v391 = vmax.f32 %v375, 0.0
  %v392 = vmax.f32 %v376, 0.0
  %v393 = vmax.f32 %v377, 0.0
  %v394 = vmax.f32 %v378, 0.0
  %v395 = vmax.f32 %v379, 0.0
  %v396 = vmax.f32 %v380, 0.0
  %v397 = vmax.f32 %v381, 0.0
  %v398 = vmax.f32 %v382, 0.0
  %v399 = vmax.f32 %v383, 0.0
  %v400 = vmax.f32 %v384, 0.0
  %v401 = vmax.f32 %v385, 0.0
  %v402 = vmax.f32 %v386, 0.0
  %v403 = vmax.f32 %v387, 0.0
  %v404 = vmax.f32 %v388, 0.0
  %v405 = vmax.f32 %v389, 0.0
  %v406 = vld [vmem:[%s3] sm:$0xff]
  %v407 = vld [vmem:[%s3 + $0x8] sm:$0xff]
  %v408 = vld [vmem:[%s3 + $0x10] sm:$0xff]
  %v409 = vld [vmem:[%s3 + $0x18] sm:$0xff]
  %v410 = vld [vmem:[%s4] sm:$0x1]
  %v412 = vlaneseq
  %v413 = vshrl.u32 %v412, 7
  %v414 = vsub.s32 0, %v413
  %v415 = vrot.slane %v410, %v414
  %vm417 = vcmask 261120
  %v419 = vsel %vm417, %v390, 0
  %v422 = vsel %vm417, %v391, 0
  %v425 = vsel %vm417, %v392, 0
  %v428 = vsel %vm417, %v393, 0
  %v431 = vsel %vm417, %v394, 0
  %v434 = vsel %vm417, %v395, 0
  %v437 = vsel %vm417, %v396, 0
  %v440 = vsel %vm417, %v397, 0
  %v443 = vsel %vm417, %v398, 0
  %v446 = vsel %vm417, %v399, 0
  %v449 = vsel %vm417, %v400, 0
  %v452 = vsel %vm417, %v401, 0
  %v455 = vsel %vm417, %v402, 0
  %v458 = vsel %vm417, %v403, 0
  %v461 = vsel %vm417, %v404, 0
  %v464 = vsel %vm417, %v405, 0
  %466 = vmatprep.subr.mxu0 0.0
  %467 = vmatpush1.msra.mxu0 %v406
  %468 = vmatprep.subr.mxu0 0.0
  %469 = vmatpush1.msra.mxu0 %v407
  %470 = vmatprep.subr.mxu0 0.0
  %471 = vmatpush1.msra.mxu0 %v408
  %472 = vmatprep.subr.mxu0 0.0
  %473 = vmatpush1.msra.mxu0 %v409
  %474 = vmatprep.subr.mxu0 0.0
  %475 = vmatpush1.msra.mxu0 0.0
  %476 = vmatprep.subr.mxu0 0.0
  %477 = vmatpush1.msra.mxu0 0.0
  %478 = vmatprep.subr.mxu0 0.0
  %479 = vmatpush1.msra.mxu0 0.0
  %480 = vmatprep.subr.mxu0 0.0
  %481 = vmatpush1.msra.mxu0 0.0
  %482 = vmatprep.subr.mxu0 0.0
  %483 = vmatpush1.msra.mxu0 0.0
  %484 = vmatprep.subr.mxu0 0.0
  %485 = vmatpush1.msra.mxu0 0.0
  %486 = vmatprep.subr.mxu0 0.0
  %487 = vmatpush1.msra.mxu0 0.0
  %488 = vmatprep.subr.mxu0 0.0
  %489 = vmatpush1.msra.mxu0 0.0
  %490 = vmatprep.subr.mxu0 0.0
  %491 = vmatpush1.msra.mxu0 0.0
  %492 = vmatprep.subr.mxu0 0.0
  %493 = vmatpush1.msra.mxu0 0.0
  %494 = vmatprep.subr.mxu0 0.0
  %495 = vmatpush1.msra.mxu0 0.0
  %496 = vmatprep.subr.mxu0 0.0
  %497 = vmatpush1.msra.mxu0 0.0
  %498 = vmatprep.subr.mxu0 0.0
  %499 = vmatpush1.msra.mxu0 0.0
  %500 = vmatprep.subr.mxu0 0.0
  %501 = vmatpush1.msra.mxu0 0.0
  %502 = vmatprep.subr.mxu0 0.0
  %503 = vmatpush1.msra.mxu0 0.0
  %504 = vmatprep.subr.mxu0 0.0
  %505 = vmatpush1.msra.mxu0 0.0
  %506 = vmatprep.subr.mxu0 0.0
  %507 = vmatpush1.msra.mxu0 0.0
  %508 = vmatprep.subr.mxu0 0.0
  %509 = vmatpush1.msra.mxu0 0.0
  %510 = vmatprep.subr.mxu0 0.0
  %511 = vmatpush1.msra.mxu0 0.0
  %512 = vmatprep.subr.mxu0 0.0
  %513 = vmatpush1.msra.mxu0 0.0
  %514 = vmatprep.subr.mxu0 0.0
  %515 = vmatpush1.msra.mxu0 0.0
  %516 = vmatprep.subr.mxu0 0.0
  %517 = vmatpush1.msra.mxu0 0.0
  %518 = vmatprep.subr.mxu0 0.0
  %519 = vmatpush1.msra.mxu0 0.0
  %520 = vmatprep.subr.mxu0 0.0
  %521 = vmatpush1.msra.mxu0 0.0
  %522 = vmatprep.subr.mxu0 0.0
  %523 = vmatpush1.msra.mxu0 0.0
  %524 = vmatprep.subr.mxu0 0.0
  %525 = vmatpush1.msra.mxu0 0.0
  %526 = vmatprep.subr.mxu0 0.0
  %527 = vmatpush1.msra.mxu0 0.0
  %528 = vmatprep.subr.mxu0 0.0
  %529 = vmatpush1.msra.mxu0 0.0
  %530 = vmatprep.mubr.f32.mxu0 0.0
  %531 = vmatmul.mubr.f32.gmra.mrb[0].mxu0 %v419
  %v532 = vpop.f32.mrb[0].mxu0
  %v533 = vadd.f32 %v415, %v532
  %v534 = vpop.f32.mrb[0].mxu0
  %535 = vmatprep.mubr.f32.mxu0 0.0
  %536 = vmatmul.mubr.f32.gmra.mrb[0].mxu0 %v422
  %v537 = vpop.f32.mrb[0].mxu0
  %v538 = vadd.f32 %v415, %v537
  %v539 = vpop.f32.mrb[0].mxu0
  %540 = vmatprep.mubr.f32.mxu0 0.0
  %541 = vmatmul.mubr.f32.gmra.mrb[0].mxu0 %v425
  %v542 = vpop.f32.mrb[0].mxu0
  %v543 = vadd.f32 %v415, %v542
  %v544 = vpop.f32.mrb[0].mxu0
  %545 = vmatprep.mubr.f32.mxu0 0.0
  %546 = vmatmul.mubr.f32.gmra.mrb[0].mxu0 %v428
  %v547 = vpop.f32.mrb[0].mxu0
  %v548 = vadd.f32 %v415, %v547
  %v549 = vpop.f32.mrb[0].mxu0
  %550 = vmatprep.mubr.f32.mxu0 0.0
  %551 = vmatmul.mubr.f32.gmra.mrb[0].mxu0 %v431
  %v552 = vpop.f32.mrb[0].mxu0
  %v553 = vadd.f32 %v415, %v552
  %v554 = vpop.f32.mrb[0].mxu0
  %555 = vmatprep.mubr.f32.mxu0 0.0
  %556 = vmatmul.mubr.f32.gmra.mrb[0].mxu0 %v434
  %v557 = vpop.f32.mrb[0].mxu0
  %v558 = vadd.f32 %v415, %v557
  %v559 = vpop.f32.mrb[0].mxu0
  %560 = vmatprep.mubr.f32.mxu0 0.0
  %561 = vmatmul.mubr.f32.gmra.mrb[0].mxu0 %v437
  %v562 = vpop.f32.mrb[0].mxu0
  %v563 = vadd.f32 %v415, %v562
  %v564 = vpop.f32.mrb[0].mxu0
  %565 = vmatprep.mubr.f32.mxu0 0.0
  %566 = vmatmul.mubr.f32.gmra.mrb[0].mxu0 %v440
  %v567 = vpop.f32.mrb[0].mxu0
  %v568 = vadd.f32 %v415, %v567
  %v569 = vpop.f32.mrb[0].mxu0
  %570 = vmatprep.mubr.f32.mxu0 0.0
  %571 = vmatmul.mubr.f32.gmra.mrb[0].mxu0 %v443
  %v572 = vpop.f32.mrb[0].mxu0
  %v573 = vadd.f32 %v415, %v572
  %v574 = vpop.f32.mrb[0].mxu0
  %575 = vmatprep.mubr.f32.mxu0 0.0
  %576 = vmatmul.mubr.f32.gmra.mrb[0].mxu0 %v446
  %v577 = vpop.f32.mrb[0].mxu0
  %v578 = vadd.f32 %v415, %v577
  %v579 = vpop.f32.mrb[0].mxu0
  %580 = vmatprep.mubr.f32.mxu0 0.0
  %581 = vmatmul.mubr.f32.gmra.mrb[0].mxu0 %v449
  %v582 = vpop.f32.mrb[0].mxu0
  %v583 = vadd.f32 %v415, %v582
  %v584 = vpop.f32.mrb[0].mxu0
  %585 = vmatprep.mubr.f32.mxu0 0.0
  %586 = vmatmul.mubr.f32.gmra.mrb[0].mxu0 %v452
  %v587 = vpop.f32.mrb[0].mxu0
  %v588 = vadd.f32 %v415, %v587
  %v589 = vpop.f32.mrb[0].mxu0
  %590 = vmatprep.mubr.f32.mxu0 0.0
  %591 = vmatmul.mubr.f32.gmra.mrb[0].mxu0 %v455
  %v592 = vpop.f32.mrb[0].mxu0
  %v593 = vadd.f32 %v415, %v592
  %v594 = vpop.f32.mrb[0].mxu0
  %595 = vmatprep.mubr.f32.mxu0 0.0
  %596 = vmatmul.mubr.f32.gmra.mrb[0].mxu0 %v458
  %v597 = vpop.f32.mrb[0].mxu0
  %v598 = vadd.f32 %v415, %v597
  %v599 = vpop.f32.mrb[0].mxu0
  %600 = vmatprep.mubr.f32.mxu0 0.0
  %601 = vmatmul.mubr.f32.gmra.mrb[0].mxu0 %v461
  %v602 = vpop.f32.mrb[0].mxu0
  %v603 = vadd.f32 %v415, %v602
  %v604 = vpop.f32.mrb[0].mxu0
  %605 = vmatprep.mubr.f32.mxu0 0.0
  %606 = vmatmul.mubr.f32.gmra.mrb[0].mxu0 %v464
  %v607 = vpop.f32.mrb[0].mxu0
  %v608 = vadd.f32 %v415, %v607
  %v609 = vpop.f32.mrb[0].mxu0
  %610 = vdwg.mxu0
  %v611 = vmax.f32 %v533, 0.0
  %v612 = vmax.f32 %v538, 0.0
  %v613 = vmax.f32 %v543, 0.0
  %v614 = vmax.f32 %v548, 0.0
  %v615 = vmax.f32 %v553, 0.0
  %v616 = vmax.f32 %v558, 0.0
  %v617 = vmax.f32 %v563, 0.0
  %v618 = vmax.f32 %v568, 0.0
  %v619 = vmax.f32 %v573, 0.0
  %v620 = vmax.f32 %v578, 0.0
  %v621 = vmax.f32 %v583, 0.0
  %v622 = vmax.f32 %v588, 0.0
  %v623 = vmax.f32 %v593, 0.0
  %v624 = vmax.f32 %v598, 0.0
  %v625 = vmax.f32 %v603, 0.0
  %v626 = vmax.f32 %v608, 0.0
  %v627 = vld [vmem:[%s5] sm:$0xff]
  %v628 = vld [vmem:[%s5 + $0x8] sm:$0xff]
  %v629 = vld [vmem:[%s5 + $0x10] sm:$0xff]
  %v630 = vld [vmem:[%s5 + $0x18] sm:$0xff]
  %v631 = vld [vmem:[%s7] sm:$0x1]
  %v633 = vlaneseq
  %v634 = vshrl.u32 %v633, 7
  %v635 = vsub.s32 0, %v634
  %v636 = vrot.slane %v631, %v635
  %v639 = vsel %vm417, %v611, 0
  %v642 = vsel %vm417, %v612, 0
  %v645 = vsel %vm417, %v613, 0
  %v648 = vsel %vm417, %v614, 0
  %v651 = vsel %vm417, %v615, 0
  %v654 = vsel %vm417, %v616, 0
  %v657 = vsel %vm417, %v617, 0
  %v660 = vsel %vm417, %v618, 0
  %v663 = vsel %vm417, %v619, 0
  %v666 = vsel %vm417, %v620, 0
  %v669 = vsel %vm417, %v621, 0
  %v672 = vsel %vm417, %v622, 0
  %v675 = vsel %vm417, %v623, 0
  %v678 = vsel %vm417, %v624, 0
  %v681 = vsel %vm417, %v625, 0
  %v684 = vsel %vm417, %v626, 0
  %686 = vmatprep.subr.mxu0 0.0
  %687 = vmatpush1.msra.mxu0 %v627
  %688 = vmatprep.subr.mxu0 0.0
  %689 = vmatpush1.msra.mxu0 %v628
  %690 = vmatprep.subr.mxu0 0.0
  %691 = vmatpush1.msra.mxu0 %v629
  %692 = vmatprep.subr.mxu0 0.0
  %693 = vmatpush1.msra.mxu0 %v630
  %694 = vmatprep.subr.mxu0 0.0
  %695 = vmatpush1.msra.mxu0 0.0
  %696 = vmatprep.subr.mxu0 0.0
  %697 = vmatpush1.msra.mxu0 0.0
  %698 = vmatprep.subr.mxu0 0.0
  %699 = vmatpush1.msra.mxu0 0.0
  %700 = vmatprep.subr.mxu0 0.0
  %701 = vmatpush1.msra.mxu0 0.0
  %702 = vmatprep.subr.mxu0 0.0
  %703 = vmatpush1.msra.mxu0 0.0
  %704 = vmatprep.subr.mxu0 0.0
  %705 = vmatpush1.msra.mxu0 0.0
  %706 = vmatprep.subr.mxu0 0.0
  %707 = vmatpush1.msra.mxu0 0.0
  %708 = vmatprep.subr.mxu0 0.0
  %709 = vmatpush1.msra.mxu0 0.0
  %710 = vmatprep.subr.mxu0 0.0
  %711 = vmatpush1.msra.mxu0 0.0
  %712 = vmatprep.subr.mxu0 0.0
  %713 = vmatpush1.msra.mxu0 0.0
  %714 = vmatprep.subr.mxu0 0.0
  %715 = vmatpush1.msra.mxu0 0.0
  %716 = vmatprep.subr.mxu0 0.0
  %717 = vmatpush1.msra.mxu0 0.0
  %718 = vmatprep.subr.mxu0 0.0
  %719 = vmatpush1.msra.mxu0 0.0
  %720 = vmatprep.subr.mxu0 0.0
  %721 = vmatpush1.msra.mxu0 0.0
  %722 = vmatprep.subr.mxu0 0.0
  %723 = vmatpush1.msra.mxu0 0.0
  %724 = vmatprep.subr.mxu0 0.0
  %725 = vmatpush1.msra.mxu0 0.0
  %726 = vmatprep.subr.mxu0 0.0
  %727 = vmatpush1.msra.mxu0 0.0
  %728 = vmatprep.subr.mxu0 0.0
  %729 = vmatpush1.msra.mxu0 0.0
  %730 = vmatprep.subr.mxu0 0.0
  %731 = vmatpush1.msra.mxu0 0.0
  %732 = vmatprep.subr.mxu0 0.0
  %733 = vmatpush1.msra.mxu0 0.0
  %734 = vmatprep.subr.mxu0 0.0
  %735 = vmatpush1.msra.mxu0 0.0
  %736 = vmatprep.subr.mxu0 0.0
  %737 = vmatpush1.msra.mxu0 0.0
  %738 = vmatprep.subr.mxu0 0.0
  %739 = vmatpush1.msra.mxu0 0.0
  %740 = vmatprep.subr.mxu0 0.0
  %741 = vmatpush1.msra.mxu0 0.0
  %742 = vmatprep.subr.mxu0 0.0
  %743 = vmatpush1.msra.mxu0 0.0
  %744 = vmatprep.subr.mxu0 0.0
  %745 = vmatpush1.msra.mxu0 0.0
  %746 = vmatprep.subr.mxu0 0.0
  %747 = vmatpush1.msra.mxu0 0.0
  %748 = vmatprep.subr.mxu0 0.0
  %749 = vmatpush1.msra.mxu0 0.0
  %750 = vmatprep.mubr.f32.mxu0 0.0
  %751 = vmatmul.mubr.f32.gmra.mrb[0].mxu0 %v639
  %v752 = vpop.f32.mrb[0].mxu0
  %v753 = vadd.f32 %v636, %v752
  %v754 = vpop.f32.mrb[0].mxu0
  %755 = vmatprep.mubr.f32.mxu0 0.0
  %756 = vmatmul.mubr.f32.gmra.mrb[0].mxu0 %v642
  %v757 = vpop.f32.mrb[0].mxu0
  %v758 = vadd.f32 %v636, %v757
  %v759 = vpop.f32.mrb[0].mxu0
  %760 = vmatprep.mubr.f32.mxu0 0.0
  %761 = vmatmul.mubr.f32.gmra.mrb[0].mxu0 %v645
  %v762 = vpop.f32.mrb[0].mxu0
  %v763 = vadd.f32 %v636, %v762
  %v764 = vpop.f32.mrb[0].mxu0
  %765 = vmatprep.mubr.f32.mxu0 0.0
  %766 = vmatmul.mubr.f32.gmra.mrb[0].mxu0 %v648
  %v767 = vpop.f32.mrb[0].mxu0
  %v768 = vadd.f32 %v636, %v767
  %v769 = vpop.f32.mrb[0].mxu0
  %770 = vmatprep.mubr.f32.mxu0 0.0
  %771 = vmatmul.mubr.f32.gmra.mrb[0].mxu0 %v651
  %v772 = vpop.f32.mrb[0].mxu0
  %v773 = vadd.f32 %v636, %v772
  %v774 = vpop.f32.mrb[0].mxu0
  %775 = vmatprep.mubr.f32.mxu0 0.0
  %776 = vmatmul.mubr.f32.gmra.mrb[0].mxu0 %v654
  %v777 = vpop.f32.mrb[0].mxu0
  %v778 = vadd.f32 %v636, %v777
  %v779 = vpop.f32.mrb[0].mxu0
  %780 = vmatprep.mubr.f32.mxu0 0.0
  %781 = vmatmul.mubr.f32.gmra.mrb[0].mxu0 %v657
  %v782 = vpop.f32.mrb[0].mxu0
  %v783 = vadd.f32 %v636, %v782
  %v784 = vpop.f32.mrb[0].mxu0
  %785 = vmatprep.mubr.f32.mxu0 0.0
  %786 = vmatmul.mubr.f32.gmra.mrb[0].mxu0 %v660
  %v787 = vpop.f32.mrb[0].mxu0
  %v788 = vadd.f32 %v636, %v787
  %v789 = vpop.f32.mrb[0].mxu0
  %790 = vmatprep.mubr.f32.mxu0 0.0
  %791 = vmatmul.mubr.f32.gmra.mrb[0].mxu0 %v663
  %v792 = vpop.f32.mrb[0].mxu0
  %v793 = vadd.f32 %v636, %v792
  %v794 = vpop.f32.mrb[0].mxu0
  %795 = vmatprep.mubr.f32.mxu0 0.0
  %796 = vmatmul.mubr.f32.gmra.mrb[0].mxu0 %v666
  %v797 = vpop.f32.mrb[0].mxu0
  %v798 = vadd.f32 %v636, %v797
  %v799 = vpop.f32.mrb[0].mxu0
  %800 = vmatprep.mubr.f32.mxu0 0.0
  %801 = vmatmul.mubr.f32.gmra.mrb[0].mxu0 %v669
  %v802 = vpop.f32.mrb[0].mxu0
  %v803 = vadd.f32 %v636, %v802
  %v804 = vpop.f32.mrb[0].mxu0
  %805 = vmatprep.mubr.f32.mxu0 0.0
  %806 = vmatmul.mubr.f32.gmra.mrb[0].mxu0 %v672
  %v807 = vpop.f32.mrb[0].mxu0
  %v808 = vadd.f32 %v636, %v807
  %v809 = vpop.f32.mrb[0].mxu0
  %810 = vmatprep.mubr.f32.mxu0 0.0
  %811 = vmatmul.mubr.f32.gmra.mrb[0].mxu0 %v675
  %v812 = vpop.f32.mrb[0].mxu0
  %v813 = vadd.f32 %v636, %v812
  %v814 = vpop.f32.mrb[0].mxu0
  %815 = vmatprep.mubr.f32.mxu0 0.0
  %816 = vmatmul.mubr.f32.gmra.mrb[0].mxu0 %v678
  %v817 = vpop.f32.mrb[0].mxu0
  %v818 = vadd.f32 %v636, %v817
  %v819 = vpop.f32.mrb[0].mxu0
  %820 = vmatprep.mubr.f32.mxu0 0.0
  %821 = vmatmul.mubr.f32.gmra.mrb[0].mxu0 %v681
  %v822 = vpop.f32.mrb[0].mxu0
  %v823 = vadd.f32 %v636, %v822
  %v824 = vpop.f32.mrb[0].mxu0
  %825 = vmatprep.mubr.f32.mxu0 0.0
  %826 = vmatmul.mubr.f32.gmra.mrb[0].mxu0 %v684
  %v827 = vpop.f32.mrb[0].mxu0
  %v828 = vadd.f32 %v636, %v827
  %v829 = vpop.f32.mrb[0].mxu0
  %830 = vdwg.mxu0
  %v831 = vld [vmem:[%s6] sm:$0xff]
  %v832 = vld [vmem:[%s6 + $0x8] sm:$0xff]
  %v833 = vld [vmem:[%s6 + $0x10] sm:$0xff]
  %v834 = vld [vmem:[%s6 + $0x18] sm:$0xff]
  %v835 = vld [vmem:[%s8] sm:$0xff]
  %v836 = vld [vmem:[%s8 + $0x8] sm:$0xff]
  %v837 = vld [vmem:[%s8 + $0x10] sm:$0xff]
  %v838 = vld [vmem:[%s8 + $0x18] sm:$0xff]
  %v839 = vld [vmem:[%s9] sm:$0xff]
  %v840 = vld [vmem:[%s9 + $0x8] sm:$0xff]
  %v841 = vld [vmem:[%s9 + $0x10] sm:$0xff]
  %v842 = vld [vmem:[%s9 + $0x18] sm:$0xff]
  %v843 = vld [vmem:[%s10] sm:$0x1]
  %v845 = vsel %vm417, 0.0, 0
  %847 = vmatprep.subr.mxu0 0.0
  %848 = vmatpush1.msra.mxu0 %v831
  %849 = vmatprep.subr.mxu0 0.0
  %850 = vmatpush1.msra.mxu0 %v832
  %851 = vmatprep.subr.mxu0 0.0
  %852 = vmatpush1.msra.mxu0 %v833
  %853 = vmatprep.subr.mxu0 0.0
  %854 = vmatpush1.msra.mxu0 %v834
  %855 = vmatprep.subr.mxu0 0.0
  %856 = vmatpush1.msra.mxu0 0.0
  %857 = vmatprep.subr.mxu0 0.0
  %858 = vmatpush1.msra.mxu0 0.0
  %859 = vmatprep.subr.mxu0 0.0
  %860 = vmatpush1.msra.mxu0 0.0
  %861 = vmatprep.subr.mxu0 0.0
  %862 = vmatpush1.msra.mxu0 0.0
  %863 = vmatprep.subr.mxu0 0.0
  %864 = vmatpush1.msra.mxu0 0.0
  %865 = vmatprep.subr.mxu0 0.0
  %866 = vmatpush1.msra.mxu0 0.0
  %867 = vmatprep.subr.mxu0 0.0
  %868 = vmatpush1.msra.mxu0 0.0
  %869 = vmatprep.subr.mxu0 0.0
  %870 = vmatpush1.msra.mxu0 0.0
  %871 = vmatprep.subr.mxu0 0.0
  %872 = vmatpush1.msra.mxu0 0.0
  %873 = vmatprep.subr.mxu0 0.0
  %874 = vmatpush1.msra.mxu0 0.0
  %875 = vmatprep.subr.mxu0 0.0
  %876 = vmatpush1.msra.mxu0 0.0
  %877 = vmatprep.subr.mxu0 0.0
  %878 = vmatpush1.msra.mxu0 0.0
  %879 = vmatprep.subr.mxu0 0.0
  %880 = vmatpush1.msra.mxu0 0.0
  %881 = vmatprep.subr.mxu0 0.0
  %882 = vmatpush1.msra.mxu0 0.0
  %883 = vmatprep.subr.mxu0 0.0
  %884 = vmatpush1.msra.mxu0 0.0
  %885 = vmatprep.subr.mxu0 0.0
  %886 = vmatpush1.msra.mxu0 0.0
  %887 = vmatprep.subr.mxu0 0.0
  %888 = vmatpush1.msra.mxu0 0.0
  %889 = vmatprep.subr.mxu0 0.0
  %890 = vmatpush1.msra.mxu0 0.0
  %891 = vmatprep.subr.mxu0 0.0
  %892 = vmatpush1.msra.mxu0 0.0
  %893 = vmatprep.subr.mxu0 0.0
  %894 = vmatpush1.msra.mxu0 0.0
  %895 = vmatprep.subr.mxu0 0.0
  %896 = vmatpush1.msra.mxu0 0.0
  %897 = vmatprep.subr.mxu0 0.0
  %898 = vmatpush1.msra.mxu0 0.0
  %899 = vmatprep.subr.mxu0 0.0
  %900 = vmatpush1.msra.mxu0 0.0
  %901 = vmatprep.subr.mxu0 0.0
  %902 = vmatpush1.msra.mxu0 0.0
  %903 = vmatprep.subr.mxu0 0.0
  %904 = vmatpush1.msra.mxu0 0.0
  %905 = vmatprep.subr.mxu0 0.0
  %906 = vmatpush1.msra.mxu0 0.0
  %907 = vmatprep.subr.mxu0 0.0
  %908 = vmatpush1.msra.mxu0 0.0
  %909 = vmatprep.subr.mxu0 0.0
  %910 = vmatpush1.msra.mxu0 0.0
  %911 = vmatprep.mubr.f32.mxu0 0.0
  %912 = vmatmul.mubr.f32.gmra.mrb[0].mxu0 %v845
  %v913 = vpop.f32.mrb[0].mxu0
  %v914 = vadd.f32 0.0, %v913
  %v915 = vpop.f32.mrb[0].mxu0
  %916 = vmatprep.mubr.f32.mxu0 0.0
  %917 = vmatmul.mubr.f32.gmra.mrb[0].mxu0 %v845
  %v918 = vpop.f32.mrb[0].mxu0
  %v919 = vadd.f32 0.0, %v918
  %v920 = vpop.f32.mrb[0].mxu0
  %921 = vmatprep.mubr.f32.mxu0 0.0
  %922 = vmatmul.mubr.f32.gmra.mrb[0].mxu0 %v845
  %v923 = vpop.f32.mrb[0].mxu0
  %v924 = vadd.f32 0.0, %v923
  %v925 = vpop.f32.mrb[0].mxu0
  %926 = vmatprep.mubr.f32.mxu0 0.0
  %927 = vmatmul.mubr.f32.gmra.mrb[0].mxu0 %v845
  %v928 = vpop.f32.mrb[0].mxu0
  %v929 = vadd.f32 0.0, %v928
  %v930 = vpop.f32.mrb[0].mxu0
  %931 = vdwg.mxu0
  %v932 = vadd.f32 %v753, %v914
  %v933 = vadd.f32 %v758, %v919
  %v934 = vadd.f32 %v793, %v924
  %v935 = vadd.f32 %v798, %v929
  %v936 = vmul.f32 %v932, 0.5
  %v937 = vmul.f32 %v933, 0.5
  %v938 = vmul.f32 %v934, 0.5
  %v939 = vmul.f32 %v935, 0.5
  %v940 = vtanh.pop %v936
  %v941 = vtanh.pop %v937
  %v942 = vtanh.pop %v938
  %v943 = vtanh.pop %v939
  %v944 = vmul.f32 %v940, 0.5
  %v945 = vmul.f32 %v941, 0.5
  %v946 = vmul.f32 %v942, 0.5
  %v947 = vmul.f32 %v943, 0.5
  %v948 = vadd.f32 %v944, 0.5
  %v949 = vadd.f32 %v945, 0.5
  %v950 = vadd.f32 %v946, 0.5
  %v951 = vadd.f32 %v947, 0.5
  %v952 = vtanh.pop %v932
  %v953 = vtanh.pop %v933
  %v954 = vtanh.pop %v934
  %v955 = vtanh.pop %v935
  %v956 = vmul.f32 %v948, 0.0
  %v957 = vmul.f32 %v949, 0.0
  %v958 = vmul.f32 %v950, 0.0
  %v959 = vmul.f32 %v951, 0.0
  %964 = vrot.lane.b32.xlu0 %v952, 64
  %v965 = vpop.permute.xlu0 %964
  %966 = vrot.lane.b32.xlu0 %v953, 64
  %v967 = vpop.permute.xlu0 %966
  %968 = vrot.lane.b32.xlu0 %v954, 64
  %v969 = vpop.permute.xlu0 %968
  %970 = vrot.lane.b32.xlu0 %v955, 64
  %v971 = vpop.permute.xlu0 %970
  %v976 = vmul.f32 %v948, %v965
  %v977 = vmul.f32 %v949, %v967
  %v978 = vmul.f32 %v950, %v969
  %v979 = vmul.f32 %v951, %v971
  %984 = vrot.lane.b32.xlu0 %v976, 32
  %v985 = vpop.permute.xlu0 %984
  %986 = vrot.lane.b32.xlu0 %v977, 32
  %v987 = vpop.permute.xlu0 %986
  %988 = vrot.lane.b32.xlu0 %v978, 32
  %v989 = vpop.permute.xlu0 %988
  %990 = vrot.lane.b32.xlu0 %v979, 32
  %v991 = vpop.permute.xlu0 %990
  %v996 = vadd.f32 %v956, %v985
  %v997 = vadd.f32 %v957, %v987
  %v998 = vadd.f32 %v958, %v989
  %v999 = vadd.f32 %v959, %v991
  %v1000 = vtanh.pop %v996
  %v1001 = vtanh.pop %v997
  %v1002 = vtanh.pop %v998
  %v1003 = vtanh.pop %v999
  %1008 = vrot.lane.b32.xlu0 %v1000, 64
  %v1009 = vpop.permute.xlu0 %1008
  %1010 = vrot.lane.b32.xlu0 %v1001, 64
  %v1011 = vpop.permute.xlu0 %1010
  %1012 = vrot.lane.b32.xlu0 %v1002, 64
  %v1013 = vpop.permute.xlu0 %1012
  %1014 = vrot.lane.b32.xlu0 %v1003, 64
  %v1015 = vpop.permute.xlu0 %1014
  %v1020 = vmul.f32 %v948, %v1009
  %v1021 = vmul.f32 %v949, %v1011
  %v1022 = vmul.f32 %v950, %v1013
  %v1023 = vmul.f32 %v951, %v1015
  %1028 = vrot.lane.b32.xlu0 %v1020, 32
  %v1029 = vpop.permute.xlu0 %1028
  %1030 = vrot.lane.b32.xlu0 %v1021, 32
  %v1031 = vpop.permute.xlu0 %1030
  %1032 = vrot.lane.b32.xlu0 %v1022, 32
  %v1033 = vpop.permute.xlu0 %1032
  %1034 = vrot.lane.b32.xlu0 %v1023, 32
  %v1035 = vpop.permute.xlu0 %1034
  %v1040 = vsel %vm417, %v1029, 0.0
  %v1041 = vsel %vm417, %v1031, 0.0
  %v1042 = vsel %vm417, %v1033, 0.0
  %v1043 = vsel %vm417, %v1035, 0.0
  %v1045 = vlaneseq
  %v1046 = vshrl.u32 %v1045, 7
  %v1047 = vsub.s32 0, %v1046
  %v1048 = vrot.slane %v843, %v1047
  %vm1050 = vcmask 523264
  %v1052 = vsel %vm1050, %v1040, 0
  %v1055 = vsel %vm1050, %v1041, 0
  %v1058 = vsel %vm1050, %v1042, 0
  %v1061 = vsel %vm1050, %v1043, 0
  %1063 = vmatprep.subr.mxu0 0.0
  %1064 = vmatpush1.msra.mxu0 %v835
  %1065 = vmatprep.subr.mxu0 0.0
  %1066 = vmatpush1.msra.mxu0 %v836
  %1067 = vmatprep.subr.mxu0 0.0
  %1068 = vmatpush1.msra.mxu0 %v837
  %1069 = vmatprep.subr.mxu0 0.0
  %1070 = vmatpush1.msra.mxu0 %v838
  %1071 = vmatprep.subr.mxu0 0.0
  %1072 = vmatpush1.msra.mxu0 %v839
  %1073 = vmatprep.subr.mxu0 0.0
  %1074 = vmatpush1.msra.mxu0 %v840
  %1075 = vmatprep.subr.mxu0 0.0
  %1076 = vmatpush1.msra.mxu0 %v841
  %1077 = vmatprep.subr.mxu0 0.0
  %1078 = vmatpush1.msra.mxu0 %v842
  %1079 = vmatprep.subr.mxu0 0.0
  %1080 = vmatpush1.msra.mxu0 0.0
  %1081 = vmatprep.subr.mxu0 0.0
  %1082 = vmatpush1.msra.mxu0 0.0
  %1083 = vmatprep.subr.mxu0 0.0
  %1084 = vmatpush1.msra.mxu0 0.0
  %1085 = vmatprep.subr.mxu0 0.0
  %1086 = vmatpush1.msra.mxu0 0.0
  %1087 = vmatprep.subr.mxu0 0.0
  %1088 = vmatpush1.msra.mxu0 0.0
  %1089 = vmatprep.subr.mxu0 0.0
  %1090 = vmatpush1.msra.mxu0 0.0
  %1091 = vmatprep.subr.mxu0 0.0
  %1092 = vmatpush1.msra.mxu0 0.0
  %1093 = vmatprep.subr.mxu0 0.0
  %1094 = vmatpush1.msra.mxu0 0.0
  %1095 = vmatprep.subr.mxu0 0.0
  %1096 = vmatpush1.msra.mxu0 0.0
  %1097 = vmatprep.subr.mxu0 0.0
  %1098 = vmatpush1.msra.mxu0 0.0
  %1099 = vmatprep.subr.mxu0 0.0
  %1100 = vmatpush1.msra.mxu0 0.0
  %1101 = vmatprep.subr.mxu0 0.0
  %1102 = vmatpush1.msra.mxu0 0.0
  %1103 = vmatprep.subr.mxu0 0.0
  %1104 = vmatpush1.msra.mxu0 0.0
  %1105 = vmatprep.subr.mxu0 0.0
  %1106 = vmatpush1.msra.mxu0 0.0
  %1107 = vmatprep.subr.mxu0 0.0
  %1108 = vmatpush1.msra.mxu0 0.0
  %1109 = vmatprep.subr.mxu0 0.0
  %1110 = vmatpush1.msra.mxu0 0.0
  %1111 = vmatprep.subr.mxu0 0.0
  %1112 = vmatpush1.msra.mxu0 0.0
  %1113 = vmatprep.subr.mxu0 0.0
  %1114 = vmatpush1.msra.mxu0 0.0
  %1115 = vmatprep.subr.mxu0 0.0
  %1116 = vmatpush1.msra.mxu0 0.0
  %1117 = vmatprep.subr.mxu0 0.0
  %1118 = vmatpush1.msra.mxu0 0.0
  %1119 = vmatprep.subr.mxu0 0.0
  %1120 = vmatpush1.msra.mxu0 0.0
  %1121 = vmatprep.subr.mxu0 0.0
  %1122 = vmatpush1.msra.mxu0 0.0
  %1123 = vmatprep.subr.mxu0 0.0
  %1124 = vmatpush1.msra.mxu0 0.0
  %1125 = vmatprep.subr.mxu0 0.0
  %1126 = vmatpush1.msra.mxu0 0.0
  %1127 = vmatprep.mubr.f32.mxu0 0.0
  %1128 = vmatmul.mubr.f32.gmra.mrb[0].mxu0 %v1052
  %v1129 = vpop.f32.mrb[0].mxu0
  %v1130 = vadd.f32 %v1048, %v1129
  %v1131 = vpop.f32.mrb[0].mxu0
  %1132 = vmatprep.mubr.f32.mxu0 0.0
  %1133 = vmatmul.mubr.f32.gmra.mrb[0].mxu0 %v1055
  %v1134 = vpop.f32.mrb[0].mxu0
  %v1135 = vadd.f32 %v1048, %v1134
  %v1136 = vpop.f32.mrb[0].mxu0
  %1137 = vmatprep.mubr.f32.mxu0 0.0
  %1138 = vmatmul.mubr.f32.gmra.mrb[0].mxu0 %v1058
  %v1139 = vpop.f32.mrb[0].mxu0
  %v1140 = vadd.f32 %v1048, %v1139
  %v1141 = vpop.f32.mrb[0].mxu0
  %1142 = vmatprep.mubr.f32.mxu0 0.0
  %1143 = vmatmul.mubr.f32.gmra.mrb[0].mxu0 %v1061
  %v1144 = vpop.f32.mrb[0].mxu0
  %v1145 = vadd.f32 %v1048, %v1144
  %v1146 = vpop.f32.mrb[0].mxu0
  %1147 = vdwg.mxu0
  %v1148 = vmul.f32 %v1130, 0.5
  %v1149 = vmul.f32 %v1135, 0.5
  %v1150 = vmul.f32 %v1140, 0.5
  %v1151 = vmul.f32 %v1145, 0.5
  %v1152 = vtanh.pop %v1148
  %v1153 = vtanh.pop %v1149
  %v1154 = vtanh.pop %v1150
  %v1155 = vtanh.pop %v1151
  %v1156 = vmul.f32 %v1152, 0.5
  %v1157 = vmul.f32 %v1153, 0.5
  %v1158 = vmul.f32 %v1154, 0.5
  %v1159 = vmul.f32 %v1155, 0.5
  %v1160 = vadd.f32 %v1156, 0.5
  %v1161 = vadd.f32 %v1157, 0.5
  %v1162 = vadd.f32 %v1158, 0.5
  %v1163 = vadd.f32 %v1159, 0.5
  %v1164 = vtanh.pop %v1130
  %v1165 = vtanh.pop %v1135
  %v1166 = vtanh.pop %v1140
  %v1167 = vtanh.pop %v1145
  %v1168 = vmul.f32 %v1160, 0.0
  %v1169 = vmul.f32 %v1161, 0.0
  %v1170 = vmul.f32 %v1162, 0.0
  %v1171 = vmul.f32 %v1163, 0.0
  %1176 = vrot.lane.b32.xlu0 %v1164, 64
  %v1177 = vpop.permute.xlu0 %1176
  %1178 = vrot.lane.b32.xlu0 %v1165, 64
  %v1179 = vpop.permute.xlu0 %1178
  %1180 = vrot.lane.b32.xlu0 %v1166, 64
  %v1181 = vpop.permute.xlu0 %1180
  %1182 = vrot.lane.b32.xlu0 %v1167, 64
  %v1183 = vpop.permute.xlu0 %1182
  %v1188 = vmul.f32 %v1160, %v1177
  %v1189 = vmul.f32 %v1161, %v1179
  %v1190 = vmul.f32 %v1162, %v1181
  %v1191 = vmul.f32 %v1163, %v1183
  %1196 = vrot.lane.b32.xlu0 %v1188, 32
  %v1197 = vpop.permute.xlu0 %1196
  %1198 = vrot.lane.b32.xlu0 %v1189, 32
  %v1199 = vpop.permute.xlu0 %1198
  %1200 = vrot.lane.b32.xlu0 %v1190, 32
  %v1201 = vpop.permute.xlu0 %1200
  %1202 = vrot.lane.b32.xlu0 %v1191, 32
  %v1203 = vpop.permute.xlu0 %1202
  %v1208 = vadd.f32 %v1168, %v1197
  %v1209 = vadd.f32 %v1169, %v1199
  %v1210 = vadd.f32 %v1170, %v1201
  %v1211 = vadd.f32 %v1171, %v1203
  %v1212 = vtanh.pop %v1208
  %v1213 = vtanh.pop %v1209
  %v1214 = vtanh.pop %v1210
  %v1215 = vtanh.pop %v1211
  %1220 = vrot.lane.b32.xlu0 %v1212, 64
  %v1221 = vpop.permute.xlu0 %1220
  %1222 = vrot.lane.b32.xlu0 %v1213, 64
  %v1223 = vpop.permute.xlu0 %1222
  %1224 = vrot.lane.b32.xlu0 %v1214, 64
  %v1225 = vpop.permute.xlu0 %1224
  %1226 = vrot.lane.b32.xlu0 %v1215, 64
  %v1227 = vpop.permute.xlu0 %1226
  %v1232 = vmul.f32 %v1160, %v1221
  %v1233 = vmul.f32 %v1161, %v1223
  %v1234 = vmul.f32 %v1162, %v1225
  %v1235 = vmul.f32 %v1163, %v1227
  %v1236 = vsel %vm417, %v1029, 0
  %v1238 = vsel %vm417, %v1031, 0
  %v1240 = vsel %vm417, %v1033, 0
  %v1242 = vsel %vm417, %v1035, 0
  %1244 = vmatprep.subr.mxu0 0.0
  %1245 = vmatpush1.msra.mxu0 %v831
  %1246 = vmatprep.subr.mxu0 0.0
  %1247 = vmatpush1.msra.mxu0 %v832
  %1248 = vmatprep.subr.mxu0 0.0
  %1249 = vmatpush1.msra.mxu0 %v833
  %1250 = vmatprep.subr.mxu0 0.0
  %1251 = vmatpush1.msra.mxu0 %v834
  %1252 = vmatprep.subr.mxu0 0.0
  %1253 = vmatpush1.msra.mxu0 0.0
  %1254 = vmatprep.subr.mxu0 0.0
  %1255 = vmatpush1.msra.mxu0 0.0
  %1256 = vmatprep.subr.mxu0 0.0
  %1257 = vmatpush1.msra.mxu0 0.0
  %1258 = vmatprep.subr.mxu0 0.0
  %1259 = vmatpush1.msra.mxu0 0.0
  %1260 = vmatprep.subr.mxu0 0.0
  %1261 = vmatpush1.msra.mxu0 0.0
  %1262 = vmatprep.subr.mxu0 0.0
  %1263 = vmatpush1.msra.mxu0 0.0
  %1264 = vmatprep.subr.mxu0 0.0
  %1265 = vmatpush1.msra.mxu0 0.0
  %1266 = vmatprep.subr.mxu0 0.0
  %1267 = vmatpush1.msra.mxu0 0.0
  %1268 = vmatprep.subr.mxu0 0.0
  %1269 = vmatpush1.msra.mxu0 0.0
  %1270 = vmatprep.subr.mxu0 0.0
  %1271 = vmatpush1.msra.mxu0 0.0
  %1272 = vmatprep.subr.mxu0 0.0
  %1273 = vmatpush1.msra.mxu0 0.0
  %1274 = vmatprep.subr.mxu0 0.0
  %1275 = vmatpush1.msra.mxu0 0.0
  %1276 = vmatprep.subr.mxu0 0.0
  %1277 = vmatpush1.msra.mxu0 0.0
  %1278 = vmatprep.subr.mxu0 0.0
  %1279 = vmatpush1.msra.mxu0 0.0
  %1280 = vmatprep.subr.mxu0 0.0
  %1281 = vmatpush1.msra.mxu0 0.0
  %1282 = vmatprep.subr.mxu0 0.0
  %1283 = vmatpush1.msra.mxu0 0.0
  %1284 = vmatprep.subr.mxu0 0.0
  %1285 = vmatpush1.msra.mxu0 0.0
  %1286 = vmatprep.subr.mxu0 0.0
  %1287 = vmatpush1.msra.mxu0 0.0
  %1288 = vmatprep.subr.mxu0 0.0
  %1289 = vmatpush1.msra.mxu0 0.0
  %1290 = vmatprep.subr.mxu0 0.0
  %1291 = vmatpush1.msra.mxu0 0.0
  %1292 = vmatprep.subr.mxu0 0.0
  %1293 = vmatpush1.msra.mxu0 0.0
  %1294 = vmatprep.subr.mxu0 0.0
  %1295 = vmatpush1.msra.mxu0 0.0
  %1296 = vmatprep.subr.mxu0 0.0
  %1297 = vmatpush1.msra.mxu0 0.0
  %1298 = vmatprep.subr.mxu0 0.0
  %1299 = vmatpush1.msra.mxu0 0.0
  %1300 = vmatprep.subr.mxu0 0.0
  %1301 = vmatpush1.msra.mxu0 0.0
  %1302 = vmatprep.subr.mxu0 0.0
  %1303 = vmatpush1.msra.mxu0 0.0
  %1304 = vmatprep.subr.mxu0 0.0
  %1305 = vmatpush1.msra.mxu0 0.0
  %1306 = vmatprep.subr.mxu0 0.0
  %1307 = vmatpush1.msra.mxu0 0.0
  %1308 = vmatprep.mubr.f32.mxu0 0.0
  %1309 = vmatmul.mubr.f32.gmra.mrb[0].mxu0 %v1236
  %v1310 = vpop.f32.mrb[0].mxu0
  %v1311 = vadd.f32 0.0, %v1310
  %v1312 = vpop.f32.mrb[0].mxu0
  %1313 = vmatprep.mubr.f32.mxu0 0.0
  %1314 = vmatmul.mubr.f32.gmra.mrb[0].mxu0 %v1238
  %v1315 = vpop.f32.mrb[0].mxu0
  %v1316 = vadd.f32 0.0, %v1315
  %v1317 = vpop.f32.mrb[0].mxu0
  %1318 = vmatprep.mubr.f32.mxu0 0.0
  %1319 = vmatmul.mubr.f32.gmra.mrb[0].mxu0 %v1240
  %v1320 = vpop.f32.mrb[0].mxu0
  %v1321 = vadd.f32 0.0, %v1320
  %v1322 = vpop.f32.mrb[0].mxu0
  %1323 = vmatprep.mubr.f32.mxu0 0.0
  %1324 = vmatmul.mubr.f32.gmra.mrb[0].mxu0 %v1242
  %v1325 = vpop.f32.mrb[0].mxu0
  %v1326 = vadd.f32 0.0, %v1325
  %v1327 = vpop.f32.mrb[0].mxu0
  %1328 = vdwg.mxu0
  %v1329 = vadd.f32 %v763, %v1311
  %v1330 = vadd.f32 %v768, %v1316
  %v1331 = vadd.f32 %v803, %v1321
  %v1332 = vadd.f32 %v808, %v1326
  %v1333 = vmul.f32 %v1329, 0.5
  %v1334 = vmul.f32 %v1330, 0.5
  %v1335 = vmul.f32 %v1331, 0.5
  %v1336 = vmul.f32 %v1332, 0.5
  %v1337 = vtanh.pop %v1333
  %v1338 = vtanh.pop %v1334
  %v1339 = vtanh.pop %v1335
  %v1340 = vtanh.pop %v1336
  %v1341 = vmul.f32 %v1337, 0.5
  %v1342 = vmul.f32 %v1338, 0.5
  %v1343 = vmul.f32 %v1339, 0.5
  %v1344 = vmul.f32 %v1340, 0.5
  %v1345 = vadd.f32 %v1341, 0.5
  %v1346 = vadd.f32 %v1342, 0.5
  %v1347 = vadd.f32 %v1343, 0.5
  %v1348 = vadd.f32 %v1344, 0.5
  %v1349 = vtanh.pop %v1329
  %v1350 = vtanh.pop %v1330
  %v1351 = vtanh.pop %v1331
  %v1352 = vtanh.pop %v1332
  %v1353 = vmul.f32 %v1345, %v996
  %v1354 = vmul.f32 %v1346, %v997
  %v1355 = vmul.f32 %v1347, %v998
  %v1356 = vmul.f32 %v1348, %v999
  %1361 = vrot.lane.b32.xlu0 %v1349, 64
  %v1362 = vpop.permute.xlu0 %1361
  %1363 = vrot.lane.b32.xlu0 %v1350, 64
  %v1364 = vpop.permute.xlu0 %1363
  %1365 = vrot.lane.b32.xlu0 %v1351, 64
  %v1366 = vpop.permute.xlu0 %1365
  %1367 = vrot.lane.b32.xlu0 %v1352, 64
  %v1368 = vpop.permute.xlu0 %1367
  %v1373 = vmul.f32 %v1345, %v1362
  %v1374 = vmul.f32 %v1346, %v1364
  %v1375 = vmul.f32 %v1347, %v1366
  %v1376 = vmul.f32 %v1348, %v1368
  %1381 = vrot.lane.b32.xlu0 %v1373, 32
  %v1382 = vpop.permute.xlu0 %1381
  %1383 = vrot.lane.b32.xlu0 %v1374, 32
  %v1384 = vpop.permute.xlu0 %1383
  %1385 = vrot.lane.b32.xlu0 %v1375, 32
  %v1386 = vpop.permute.xlu0 %1385
  %1387 = vrot.lane.b32.xlu0 %v1376, 32
  %v1388 = vpop.permute.xlu0 %1387
  %v1393 = vadd.f32 %v1353, %v1382
  %v1394 = vadd.f32 %v1354, %v1384
  %v1395 = vadd.f32 %v1355, %v1386
  %v1396 = vadd.f32 %v1356, %v1388
  %v1397 = vtanh.pop %v1393
  %v1398 = vtanh.pop %v1394
  %v1399 = vtanh.pop %v1395
  %v1400 = vtanh.pop %v1396
  %1405 = vrot.lane.b32.xlu0 %v1397, 64
  %v1406 = vpop.permute.xlu0 %1405
  %1407 = vrot.lane.b32.xlu0 %v1398, 64
  %v1408 = vpop.permute.xlu0 %1407
  %1409 = vrot.lane.b32.xlu0 %v1399, 64
  %v1410 = vpop.permute.xlu0 %1409
  %1411 = vrot.lane.b32.xlu0 %v1400, 64
  %v1412 = vpop.permute.xlu0 %1411
  %v1417 = vmul.f32 %v1345, %v1406
  %v1418 = vmul.f32 %v1346, %v1408
  %v1419 = vmul.f32 %v1347, %v1410
  %v1420 = vmul.f32 %v1348, %v1412
  %1425 = vrot.lane.b32.xlu0 %v1417, 32
  %v1426 = vpop.permute.xlu0 %1425
  %1427 = vrot.lane.b32.xlu0 %v1418, 32
  %v1428 = vpop.permute.xlu0 %1427
  %1429 = vrot.lane.b32.xlu0 %v1419, 32
  %v1430 = vpop.permute.xlu0 %1429
  %1431 = vrot.lane.b32.xlu0 %v1420, 32
  %v1432 = vpop.permute.xlu0 %1431
  %1441 = vrot.lane.b32.xlu0 %v1232, 64
  %v1442 = vpop.permute.xlu0 %1441
  %1443 = vrot.lane.b32.xlu0 %v1233, 64
  %v1444 = vpop.permute.xlu0 %1443
  %1445 = vrot.lane.b32.xlu0 %v1234, 64
  %v1446 = vpop.permute.xlu0 %1445
  %1447 = vrot.lane.b32.xlu0 %v1235, 64
  %v1448 = vpop.permute.xlu0 %1447
  %v1453 = vsel %vm417, %v1426, %v1442
  %v1454 = vsel %vm417, %v1428, %v1444
  %v1455 = vsel %vm417, %v1430, %v1446
  %v1456 = vsel %vm417, %v1432, %v1448
  %v1458 = vsel %vm1050, %v1453, 0
  %v1461 = vsel %vm1050, %v1454, 0
  %v1464 = vsel %vm1050, %v1455, 0
  %v1467 = vsel %vm1050, %v1456, 0
  %1469 = vmatprep.subr.mxu0 0.0
  %1470 = vmatpush1.msra.mxu0 %v835
  %1471 = vmatprep.subr.mxu0 0.0
  %1472 = vmatpush1.msra.mxu0 %v836
  %1473 = vmatprep.subr.mxu0 0.0
  %1474 = vmatpush1.msra.mxu0 %v837
  %1475 = vmatprep.subr.mxu0 0.0
  %1476 = vmatpush1.msra.mxu0 %v838
  %1477 = vmatprep.subr.mxu0 0.0
  %1478 = vmatpush1.msra.mxu0 %v839
  %1479 = vmatprep.subr.mxu0 0.0
  %1480 = vmatpush1.msra.mxu0 %v840
  %1481 = vmatprep.subr.mxu0 0.0
  %1482 = vmatpush1.msra.mxu0 %v841
  %1483 = vmatprep.subr.mxu0 0.0
  %1484 = vmatpush1.msra.mxu0 %v842
  %1485 = vmatprep.subr.mxu0 0.0
  %1486 = vmatpush1.msra.mxu0 0.0
  %1487 = vmatprep.subr.mxu0 0.0
  %1488 = vmatpush1.msra.mxu0 0.0
  %1489 = vmatprep.subr.mxu0 0.0
  %1490 = vmatpush1.msra.mxu0 0.0
  %1491 = vmatprep.subr.mxu0 0.0
  %1492 = vmatpush1.msra.mxu0 0.0
  %1493 = vmatprep.subr.mxu0 0.0
  %1494 = vmatpush1.msra.mxu0 0.0
  %1495 = vmatprep.subr.mxu0 0.0
  %1496 = vmatpush1.msra.mxu0 0.0
  %1497 = vmatprep.subr.mxu0 0.0
  %1498 = vmatpush1.msra.mxu0 0.0
  %1499 = vmatprep.subr.mxu0 0.0
  %1500 = vmatpush1.msra.mxu0 0.0
  %1501 = vmatprep.subr.mxu0 0.0
  %1502 = vmatpush1.msra.mxu0 0.0
  %1503 = vmatprep.subr.mxu0 0.0
  %1504 = vmatpush1.msra.mxu0 0.0
  %1505 = vmatprep.subr.mxu0 0.0
  %1506 = vmatpush1.msra.mxu0 0.0
  %1507 = vmatprep.subr.mxu0 0.0
  %1508 = vmatpush1.msra.mxu0 0.0
  %1509 = vmatprep.subr.mxu0 0.0
  %1510 = vmatpush1.msra.mxu0 0.0
  %1511 = vmatprep.subr.mxu0 0.0
  %1512 = vmatpush1.msra.mxu0 0.0
  %1513 = vmatprep.subr.mxu0 0.0
  %1514 = vmatpush1.msra.mxu0 0.0
  %1515 = vmatprep.subr.mxu0 0.0
  %1516 = vmatpush1.msra.mxu0 0.0
  %1517 = vmatprep.subr.mxu0 0.0
  %1518 = vmatpush1.msra.mxu0 0.0
  %1519 = vmatprep.subr.mxu0 0.0
  %1520 = vmatpush1.msra.mxu0 0.0
  %1521 = vmatprep.subr.mxu0 0.0
  %1522 = vmatpush1.msra.mxu0 0.0
  %1523 = vmatprep.subr.mxu0 0.0
  %1524 = vmatpush1.msra.mxu0 0.0
  %1525 = vmatprep.subr.mxu0 0.0
  %1526 = vmatpush1.msra.mxu0 0.0
  %1527 = vmatprep.subr.mxu0 0.0
  %1528 = vmatpush1.msra.mxu0 0.0
  %1529 = vmatprep.subr.mxu0 0.0
  %1530 = vmatpush1.msra.mxu0 0.0
  %1531 = vmatprep.subr.mxu0 0.0
  %1532 = vmatpush1.msra.mxu0 0.0
  %1533 = vmatprep.mubr.f32.mxu0 0.0
  %1534 = vmatmul.mubr.f32.gmra.mrb[0].mxu0 %v1458
  %v1535 = vpop.f32.mrb[0].mxu0
  %v1536 = vadd.f32 %v1048, %v1535
  %v1537 = vpop.f32.mrb[0].mxu0
  %1538 = vmatprep.mubr.f32.mxu0 0.0
  %1539 = vmatmul.mubr.f32.gmra.mrb[0].mxu0 %v1461
  %v1540 = vpop.f32.mrb[0].mxu0
  %v1541 = vadd.f32 %v1048, %v1540
  %v1542 = vpop.f32.mrb[0].mxu0
  %1543 = vmatprep.mubr.f32.mxu0 0.0
  %1544 = vmatmul.mubr.f32.gmra.mrb[0].mxu0 %v1464
  %v1545 = vpop.f32.mrb[0].mxu0
  %v1546 = vadd.f32 %v1048, %v1545
  %v1547 = vpop.f32.mrb[0].mxu0
  %1548 = vmatprep.mubr.f32.mxu0 0.0
  %1549 = vmatmul.mubr.f32.gmra.mrb[0].mxu0 %v1467
  %v1550 = vpop.f32.mrb[0].mxu0
  %v1551 = vadd.f32 %v1048, %v1550
  %v1552 = vpop.f32.mrb[0].mxu0
  %1553 = vdwg.mxu0
  %v1554 = vmul.f32 %v1536, 0.5
  %v1555 = vmul.f32 %v1541, 0.5
  %v1556 = vmul.f32 %v1546, 0.5
  %v1557 = vmul.f32 %v1551, 0.5
  %v1558 = vtanh.pop %v1554
  %v1559 = vtanh.pop %v1555
  %v1560 = vtanh.pop %v1556
  %v1561 = vtanh.pop %v1557
  %v1562 = vmul.f32 %v1558, 0.5
  %v1563 = vmul.f32 %v1559, 0.5
  %v1564 = vmul.f32 %v1560, 0.5
  %v1565 = vmul.f32 %v1561, 0.5
  %v1566 = vadd.f32 %v1562, 0.5
  %v1567 = vadd.f32 %v1563, 0.5
  %v1568 = vadd.f32 %v1564, 0.5
  %v1569 = vadd.f32 %v1565, 0.5
  %v1570 = vtanh.pop %v1536
  %v1571 = vtanh.pop %v1541
  %v1572 = vtanh.pop %v1546
  %v1573 = vtanh.pop %v1551
  %v1574 = vmul.f32 %v1566, %v1208
  %v1575 = vmul.f32 %v1567, %v1209
  %v1576 = vmul.f32 %v1568, %v1210
  %v1577 = vmul.f32 %v1569, %v1211
  %1582 = vrot.lane.b32.xlu0 %v1570, 64
  %v1583 = vpop.permute.xlu0 %1582
  %1584 = vrot.lane.b32.xlu0 %v1571, 64
  %v1585 = vpop.permute.xlu0 %1584
  %1586 = vrot.lane.b32.xlu0 %v1572, 64
  %v1587 = vpop.permute.xlu0 %1586
  %1588 = vrot.lane.b32.xlu0 %v1573, 64
  %v1589 = vpop.permute.xlu0 %1588
  %v1594 = vmul.f32 %v1566, %v1583
  %v1595 = vmul.f32 %v1567, %v1585
  %v1596 = vmul.f32 %v1568, %v1587
  %v1597 = vmul.f32 %v1569, %v1589
  %1602 = vrot.lane.b32.xlu0 %v1594, 32
  %v1603 = vpop.permute.xlu0 %1602
  %1604 = vrot.lane.b32.xlu0 %v1595, 32
  %v1605 = vpop.permute.xlu0 %1604
  %1606 = vrot.lane.b32.xlu0 %v1596, 32
  %v1607 = vpop.permute.xlu0 %1606
  %1608 = vrot.lane.b32.xlu0 %v1597, 32
  %v1609 = vpop.permute.xlu0 %1608
  %v1614 = vadd.f32 %v1574, %v1603
  %v1615 = vadd.f32 %v1575, %v1605
  %v1616 = vadd.f32 %v1576, %v1607
  %v1617 = vadd.f32 %v1577, %v1609
  %v1618 = vtanh.pop %v1614
  %v1619 = vtanh.pop %v1615
  %v1620 = vtanh.pop %v1616
  %v1621 = vtanh.pop %v1617
  %1626 = vrot.lane.b32.xlu0 %v1618, 64
  %v1627 = vpop.permute.xlu0 %1626
  %1628 = vrot.lane.b32.xlu0 %v1619, 64
  %v1629 = vpop.permute.xlu0 %1628
  %1630 = vrot.lane.b32.xlu0 %v1620, 64
  %v1631 = vpop.permute.xlu0 %1630
  %1632 = vrot.lane.b32.xlu0 %v1621, 64
  %v1633 = vpop.permute.xlu0 %1632
  %v1638 = vmul.f32 %v1566, %v1627
  %v1639 = vmul.f32 %v1567, %v1629
  %v1640 = vmul.f32 %v1568, %v1631
  %v1641 = vmul.f32 %v1569, %v1633
  %v1642 = vsel %vm417, %v1426, 0
  %v1644 = vsel %vm417, %v1428, 0
  %v1646 = vsel %vm417, %v1430, 0
  %v1648 = vsel %vm417, %v1432, 0
  %1650 = vmatprep.subr.mxu0 0.0
  %1651 = vmatpush1.msra.mxu0 %v831
  %1652 = vmatprep.subr.mxu0 0.0
  %1653 = vmatpush1.msra.mxu0 %v832
  %1654 = vmatprep.subr.mxu0 0.0
  %1655 = vmatpush1.msra.mxu0 %v833
  %1656 = vmatprep.subr.mxu0 0.0
  %1657 = vmatpush1.msra.mxu0 %v834
  %1658 = vmatprep.subr.mxu0 0.0
  %1659 = vmatpush1.msra.mxu0 0.0
  %1660 = vmatprep.subr.mxu0 0.0
  %1661 = vmatpush1.msra.mxu0 0.0
  %1662 = vmatprep.subr.mxu0 0.0
  %1663 = vmatpush1.msra.mxu0 0.0
  %1664 = vmatprep.subr.mxu0 0.0
  %1665 = vmatpush1.msra.mxu0 0.0
  %1666 = vmatprep.subr.mxu0 0.0
  %1667 = vmatpush1.msra.mxu0 0.0
  %1668 = vmatprep.subr.mxu0 0.0
  %1669 = vmatpush1.msra.mxu0 0.0
  %1670 = vmatprep.subr.mxu0 0.0
  %1671 = vmatpush1.msra.mxu0 0.0
  %1672 = vmatprep.subr.mxu0 0.0
  %1673 = vmatpush1.msra.mxu0 0.0
  %1674 = vmatprep.subr.mxu0 0.0
  %1675 = vmatpush1.msra.mxu0 0.0
  %1676 = vmatprep.subr.mxu0 0.0
  %1677 = vmatpush1.msra.mxu0 0.0
  %1678 = vmatprep.subr.mxu0 0.0
  %1679 = vmatpush1.msra.mxu0 0.0
  %1680 = vmatprep.subr.mxu0 0.0
  %1681 = vmatpush1.msra.mxu0 0.0
  %1682 = vmatprep.subr.mxu0 0.0
  %1683 = vmatpush1.msra.mxu0 0.0
  %1684 = vmatprep.subr.mxu0 0.0
  %1685 = vmatpush1.msra.mxu0 0.0
  %1686 = vmatprep.subr.mxu0 0.0
  %1687 = vmatpush1.msra.mxu0 0.0
  %1688 = vmatprep.subr.mxu0 0.0
  %1689 = vmatpush1.msra.mxu0 0.0
  %1690 = vmatprep.subr.mxu0 0.0
  %1691 = vmatpush1.msra.mxu0 0.0
  %1692 = vmatprep.subr.mxu0 0.0
  %1693 = vmatpush1.msra.mxu0 0.0
  %1694 = vmatprep.subr.mxu0 0.0
  %1695 = vmatpush1.msra.mxu0 0.0
  %1696 = vmatprep.subr.mxu0 0.0
  %1697 = vmatpush1.msra.mxu0 0.0
  %1698 = vmatprep.subr.mxu0 0.0
  %1699 = vmatpush1.msra.mxu0 0.0
  %1700 = vmatprep.subr.mxu0 0.0
  %1701 = vmatpush1.msra.mxu0 0.0
  %1702 = vmatprep.subr.mxu0 0.0
  %1703 = vmatpush1.msra.mxu0 0.0
  %1704 = vmatprep.subr.mxu0 0.0
  %1705 = vmatpush1.msra.mxu0 0.0
  %1706 = vmatprep.subr.mxu0 0.0
  %1707 = vmatpush1.msra.mxu0 0.0
  %1708 = vmatprep.subr.mxu0 0.0
  %1709 = vmatpush1.msra.mxu0 0.0
  %1710 = vmatprep.subr.mxu0 0.0
  %1711 = vmatpush1.msra.mxu0 0.0
  %1712 = vmatprep.subr.mxu0 0.0
  %1713 = vmatpush1.msra.mxu0 0.0
  %1714 = vmatprep.mubr.f32.mxu0 0.0
  %1715 = vmatmul.mubr.f32.gmra.mrb[0].mxu0 %v1642
  %v1716 = vpop.f32.mrb[0].mxu0
  %v1717 = vadd.f32 0.0, %v1716
  %v1718 = vpop.f32.mrb[0].mxu0
  %1719 = vmatprep.mubr.f32.mxu0 0.0
  %1720 = vmatmul.mubr.f32.gmra.mrb[0].mxu0 %v1644
  %v1721 = vpop.f32.mrb[0].mxu0
  %v1722 = vadd.f32 0.0, %v1721
  %v1723 = vpop.f32.mrb[0].mxu0
  %1724 = vmatprep.mubr.f32.mxu0 0.0
  %1725 = vmatmul.mubr.f32.gmra.mrb[0].mxu0 %v1646
  %v1726 = vpop.f32.mrb[0].mxu0
  %v1727 = vadd.f32 0.0, %v1726
  %v1728 = vpop.f32.mrb[0].mxu0
  %1729 = vmatprep.mubr.f32.mxu0 0.0
  %1730 = vmatmul.mubr.f32.gmra.mrb[0].mxu0 %v1648
  %v1731 = vpop.f32.mrb[0].mxu0
  %v1732 = vadd.f32 0.0, %v1731
  %v1733 = vpop.f32.mrb[0].mxu0
  %1734 = vdwg.mxu0
  %v1735 = vadd.f32 %v773, %v1717
  %v1736 = vadd.f32 %v778, %v1722
  %v1737 = vadd.f32 %v813, %v1727
  %v1738 = vadd.f32 %v818, %v1732
  %v1739 = vmul.f32 %v1735, 0.5
  %v1740 = vmul.f32 %v1736, 0.5
  %v1741 = vmul.f32 %v1737, 0.5
  %v1742 = vmul.f32 %v1738, 0.5
  %v1743 = vtanh.pop %v1739
  %v1744 = vtanh.pop %v1740
  %v1745 = vtanh.pop %v1741
  %v1746 = vtanh.pop %v1742
  %v1747 = vmul.f32 %v1743, 0.5
  %v1748 = vmul.f32 %v1744, 0.5
  %v1749 = vmul.f32 %v1745, 0.5
  %v1750 = vmul.f32 %v1746, 0.5
  %v1751 = vadd.f32 %v1747, 0.5
  %v1752 = vadd.f32 %v1748, 0.5
  %v1753 = vadd.f32 %v1749, 0.5
  %v1754 = vadd.f32 %v1750, 0.5
  %v1755 = vtanh.pop %v1735
  %v1756 = vtanh.pop %v1736
  %v1757 = vtanh.pop %v1737
  %v1758 = vtanh.pop %v1738
  %v1759 = vmul.f32 %v1751, %v1393
  %v1760 = vmul.f32 %v1752, %v1394
  %v1761 = vmul.f32 %v1753, %v1395
  %v1762 = vmul.f32 %v1754, %v1396
  %1767 = vrot.lane.b32.xlu0 %v1755, 64
  %v1768 = vpop.permute.xlu0 %1767
  %1769 = vrot.lane.b32.xlu0 %v1756, 64
  %v1770 = vpop.permute.xlu0 %1769
  %1771 = vrot.lane.b32.xlu0 %v1757, 64
  %v1772 = vpop.permute.xlu0 %1771
  %1773 = vrot.lane.b32.xlu0 %v1758, 64
  %v1774 = vpop.permute.xlu0 %1773
  %v1779 = vmul.f32 %v1751, %v1768
  %v1780 = vmul.f32 %v1752, %v1770
  %v1781 = vmul.f32 %v1753, %v1772
  %v1782 = vmul.f32 %v1754, %v1774
  %1787 = vrot.lane.b32.xlu0 %v1779, 32
  %v1788 = vpop.permute.xlu0 %1787
  %1789 = vrot.lane.b32.xlu0 %v1780, 32
  %v1790 = vpop.permute.xlu0 %1789
  %1791 = vrot.lane.b32.xlu0 %v1781, 32
  %v1792 = vpop.permute.xlu0 %1791
  %1793 = vrot.lane.b32.xlu0 %v1782, 32
  %v1794 = vpop.permute.xlu0 %1793
  %v1799 = vadd.f32 %v1759, %v1788
  %v1800 = vadd.f32 %v1760, %v1790
  %v1801 = vadd.f32 %v1761, %v1792
  %v1802 = vadd.f32 %v1762, %v1794
  %v1803 = vtanh.pop %v1799
  %v1804 = vtanh.pop %v1800
  %v1805 = vtanh.pop %v1801
  %v1806 = vtanh.pop %v1802
  %1811 = vrot.lane.b32.xlu0 %v1803, 64
  %v1812 = vpop.permute.xlu0 %1811
  %1813 = vrot.lane.b32.xlu0 %v1804, 64
  %v1814 = vpop.permute.xlu0 %1813
  %1815 = vrot.lane.b32.xlu0 %v1805, 64
  %v1816 = vpop.permute.xlu0 %1815
  %1817 = vrot.lane.b32.xlu0 %v1806, 64
  %v1818 = vpop.permute.xlu0 %1817
  %v1823 = vmul.f32 %v1751, %v1812
  %v1824 = vmul.f32 %v1752, %v1814
  %v1825 = vmul.f32 %v1753, %v1816
  %v1826 = vmul.f32 %v1754, %v1818
  %1831 = vrot.lane.b32.xlu0 %v1823, 32
  %v1832 = vpop.permute.xlu0 %1831
  %1833 = vrot.lane.b32.xlu0 %v1824, 32
  %v1834 = vpop.permute.xlu0 %1833
  %1835 = vrot.lane.b32.xlu0 %v1825, 32
  %v1836 = vpop.permute.xlu0 %1835
  %1837 = vrot.lane.b32.xlu0 %v1826, 32
  %v1838 = vpop.permute.xlu0 %1837
  %1847 = vrot.lane.b32.xlu0 %v1638, 64
  %v1848 = vpop.permute.xlu0 %1847
  %1849 = vrot.lane.b32.xlu0 %v1639, 64
  %v1850 = vpop.permute.xlu0 %1849
  %1851 = vrot.lane.b32.xlu0 %v1640, 64
  %v1852 = vpop.permute.xlu0 %1851
  %1853 = vrot.lane.b32.xlu0 %v1641, 64
  %v1854 = vpop.permute.xlu0 %1853
  %v1859 = vsel %vm417, %v1832, %v1848
  %v1860 = vsel %vm417, %v1834, %v1850
  %v1861 = vsel %vm417, %v1836, %v1852
  %v1862 = vsel %vm417, %v1838, %v1854
  %v1864 = vsel %vm1050, %v1859, 0
  %v1867 = vsel %vm1050, %v1860, 0
  %v1870 = vsel %vm1050, %v1861, 0
  %v1873 = vsel %vm1050, %v1862, 0
  %1875 = vmatprep.subr.mxu0 0.0
  %1876 = vmatpush1.msra.mxu0 %v835
  %1877 = vmatprep.subr.mxu0 0.0
  %1878 = vmatpush1.msra.mxu0 %v836
  %1879 = vmatprep.subr.mxu0 0.0
  %1880 = vmatpush1.msra.mxu0 %v837
  %1881 = vmatprep.subr.mxu0 0.0
  %1882 = vmatpush1.msra.mxu0 %v838
  %1883 = vmatprep.subr.mxu0 0.0
  %1884 = vmatpush1.msra.mxu0 %v839
  %1885 = vmatprep.subr.mxu0 0.0
  %1886 = vmatpush1.msra.mxu0 %v840
  %1887 = vmatprep.subr.mxu0 0.0
  %1888 = vmatpush1.msra.mxu0 %v841
  %1889 = vmatprep.subr.mxu0 0.0
  %1890 = vmatpush1.msra.mxu0 %v842
  %1891 = vmatprep.subr.mxu0 0.0
  %1892 = vmatpush1.msra.mxu0 0.0
  %1893 = vmatprep.subr.mxu0 0.0
  %1894 = vmatpush1.msra.mxu0 0.0
  %1895 = vmatprep.subr.mxu0 0.0
  %1896 = vmatpush1.msra.mxu0 0.0
  %1897 = vmatprep.subr.mxu0 0.0
  %1898 = vmatpush1.msra.mxu0 0.0
  %1899 = vmatprep.subr.mxu0 0.0
  %1900 = vmatpush1.msra.mxu0 0.0
  %1901 = vmatprep.subr.mxu0 0.0
  %1902 = vmatpush1.msra.mxu0 0.0
  %1903 = vmatprep.subr.mxu0 0.0
  %1904 = vmatpush1.msra.mxu0 0.0
  %1905 = vmatprep.subr.mxu0 0.0
  %1906 = vmatpush1.msra.mxu0 0.0
  %1907 = vmatprep.subr.mxu0 0.0
  %1908 = vmatpush1.msra.mxu0 0.0
  %1909 = vmatprep.subr.mxu0 0.0
  %1910 = vmatpush1.msra.mxu0 0.0
  %1911 = vmatprep.subr.mxu0 0.0
  %1912 = vmatpush1.msra.mxu0 0.0
  %1913 = vmatprep.subr.mxu0 0.0
  %1914 = vmatpush1.msra.mxu0 0.0
  %1915 = vmatprep.subr.mxu0 0.0
  %1916 = vmatpush1.msra.mxu0 0.0
  %1917 = vmatprep.subr.mxu0 0.0
  %1918 = vmatpush1.msra.mxu0 0.0
  %1919 = vmatprep.subr.mxu0 0.0
  %1920 = vmatpush1.msra.mxu0 0.0
  %1921 = vmatprep.subr.mxu0 0.0
  %1922 = vmatpush1.msra.mxu0 0.0
  %1923 = vmatprep.subr.mxu0 0.0
  %1924 = vmatpush1.msra.mxu0 0.0
  %1925 = vmatprep.subr.mxu0 0.0
  %1926 = vmatpush1.msra.mxu0 0.0
  %1927 = vmatprep.subr.mxu0 0.0
  %1928 = vmatpush1.msra.mxu0 0.0
  %1929 = vmatprep.subr.mxu0 0.0
  %1930 = vmatpush1.msra.mxu0 0.0
  %1931 = vmatprep.subr.mxu0 0.0
  %1932 = vmatpush1.msra.mxu0 0.0
  %1933 = vmatprep.subr.mxu0 0.0
  %1934 = vmatpush1.msra.mxu0 0.0
  %1935 = vmatprep.subr.mxu0 0.0
  %1936 = vmatpush1.msra.mxu0 0.0
  %1937 = vmatprep.subr.mxu0 0.0
  %1938 = vmatpush1.msra.mxu0 0.0
  %1939 = vmatprep.mubr.f32.mxu0 0.0
  %1940 = vmatmul.mubr.f32.gmra.mrb[0].mxu0 %v1864
  %v1941 = vpop.f32.mrb[0].mxu0
  %v1942 = vadd.f32 %v1048, %v1941
  %v1943 = vpop.f32.mrb[0].mxu0
  %1944 = vmatprep.mubr.f32.mxu0 0.0
  %1945 = vmatmul.mubr.f32.gmra.mrb[0].mxu0 %v1867
  %v1946 = vpop.f32.mrb[0].mxu0
  %v1947 = vadd.f32 %v1048, %v1946
  %v1948 = vpop.f32.mrb[0].mxu0
  %1949 = vmatprep.mubr.f32.mxu0 0.0
  %1950 = vmatmul.mubr.f32.gmra.mrb[0].mxu0 %v1870
  %v1951 = vpop.f32.mrb[0].mxu0
  %v1952 = vadd.f32 %v1048, %v1951
  %v1953 = vpop.f32.mrb[0].mxu0
  %1954 = vmatprep.mubr.f32.mxu0 0.0
  %1955 = vmatmul.mubr.f32.gmra.mrb[0].mxu0 %v1873
  %v1956 = vpop.f32.mrb[0].mxu0
  %v1957 = vadd.f32 %v1048, %v1956
  %v1958 = vpop.f32.mrb[0].mxu0
  %1959 = vdwg.mxu0
  %v1960 = vmul.f32 %v1942, 0.5
  %v1961 = vmul.f32 %v1947, 0.5
  %v1962 = vmul.f32 %v1952, 0.5
  %v1963 = vmul.f32 %v1957, 0.5
  %v1964 = vtanh.pop %v1960
  %v1965 = vtanh.pop %v1961
  %v1966 = vtanh.pop %v1962
  %v1967 = vtanh.pop %v1963
  %v1968 = vmul.f32 %v1964, 0.5
  %v1969 = vmul.f32 %v1965, 0.5
  %v1970 = vmul.f32 %v1966, 0.5
  %v1971 = vmul.f32 %v1967, 0.5
  %v1972 = vadd.f32 %v1968, 0.5
  %v1973 = vadd.f32 %v1969, 0.5
  %v1974 = vadd.f32 %v1970, 0.5
  %v1975 = vadd.f32 %v1971, 0.5
  %v1976 = vtanh.pop %v1942
  %v1977 = vtanh.pop %v1947
  %v1978 = vtanh.pop %v1952
  %v1979 = vtanh.pop %v1957
  %v1980 = vmul.f32 %v1972, %v1614
  %v1981 = vmul.f32 %v1973, %v1615
  %v1982 = vmul.f32 %v1974, %v1616
  %v1983 = vmul.f32 %v1975, %v1617
  %1988 = vrot.lane.b32.xlu0 %v1976, 64
  %v1989 = vpop.permute.xlu0 %1988
  %1990 = vrot.lane.b32.xlu0 %v1977, 64
  %v1991 = vpop.permute.xlu0 %1990
  %1992 = vrot.lane.b32.xlu0 %v1978, 64
  %v1993 = vpop.permute.xlu0 %1992
  %1994 = vrot.lane.b32.xlu0 %v1979, 64
  %v1995 = vpop.permute.xlu0 %1994
  %v2000 = vmul.f32 %v1972, %v1989
  %v2001 = vmul.f32 %v1973, %v1991
  %v2002 = vmul.f32 %v1974, %v1993
  %v2003 = vmul.f32 %v1975, %v1995
  %2008 = vrot.lane.b32.xlu0 %v2000, 32
  %v2009 = vpop.permute.xlu0 %2008
  %2010 = vrot.lane.b32.xlu0 %v2001, 32
  %v2011 = vpop.permute.xlu0 %2010
  %2012 = vrot.lane.b32.xlu0 %v2002, 32
  %v2013 = vpop.permute.xlu0 %2012
  %2014 = vrot.lane.b32.xlu0 %v2003, 32
  %v2015 = vpop.permute.xlu0 %2014
  %v2020 = vadd.f32 %v1980, %v2009
  %v2021 = vadd.f32 %v1981, %v2011
  %v2022 = vadd.f32 %v1982, %v2013
  %v2023 = vadd.f32 %v1983, %v2015
  %v2024 = vtanh.pop %v2020
  %v2025 = vtanh.pop %v2021
  %v2026 = vtanh.pop %v2022
  %v2027 = vtanh.pop %v2023
  %2032 = vrot.lane.b32.xlu0 %v2024, 64
  %v2033 = vpop.permute.xlu0 %2032
  %2034 = vrot.lane.b32.xlu0 %v2025, 64
  %v2035 = vpop.permute.xlu0 %2034
  %2036 = vrot.lane.b32.xlu0 %v2026, 64
  %v2037 = vpop.permute.xlu0 %2036
  %2038 = vrot.lane.b32.xlu0 %v2027, 64
  %v2039 = vpop.permute.xlu0 %2038
  %v2044 = vmul.f32 %v1972, %v2033
  %v2045 = vmul.f32 %v1973, %v2035
  %v2046 = vmul.f32 %v1974, %v2037
  %v2047 = vmul.f32 %v1975, %v2039
  %v2048 = vsel %vm417, %v1832, 0
  %v2050 = vsel %vm417, %v1834, 0
  %v2052 = vsel %vm417, %v1836, 0
  %v2054 = vsel %vm417, %v1838, 0
  %2056 = vmatprep.subr.mxu0 0.0
  %2057 = vmatpush1.msra.mxu0 %v831
  %2058 = vmatprep.subr.mxu0 0.0
  %2059 = vmatpush1.msra.mxu0 %v832
  %2060 = vmatprep.subr.mxu0 0.0
  %2061 = vmatpush1.msra.mxu0 %v833
  %2062 = vmatprep.subr.mxu0 0.0
  %2063 = vmatpush1.msra.mxu0 %v834
  %2064 = vmatprep.subr.mxu0 0.0
  %2065 = vmatpush1.msra.mxu0 0.0
  %2066 = vmatprep.subr.mxu0 0.0
  %2067 = vmatpush1.msra.mxu0 0.0
  %2068 = vmatprep.subr.mxu0 0.0
  %2069 = vmatpush1.msra.mxu0 0.0
  %2070 = vmatprep.subr.mxu0 0.0
  %2071 = vmatpush1.msra.mxu0 0.0
  %2072 = vmatprep.subr.mxu0 0.0
  %2073 = vmatpush1.msra.mxu0 0.0
  %2074 = vmatprep.subr.mxu0 0.0
  %2075 = vmatpush1.msra.mxu0 0.0
  %2076 = vmatprep.subr.mxu0 0.0
  %2077 = vmatpush1.msra.mxu0 0.0
  %2078 = vmatprep.subr.mxu0 0.0
  %2079 = vmatpush1.msra.mxu0 0.0
  %2080 = vmatprep.subr.mxu0 0.0
  %2081 = vmatpush1.msra.mxu0 0.0
  %2082 = vmatprep.subr.mxu0 0.0
  %2083 = vmatpush1.msra.mxu0 0.0
  %2084 = vmatprep.subr.mxu0 0.0
  %2085 = vmatpush1.msra.mxu0 0.0
  %2086 = vmatprep.subr.mxu0 0.0
  %2087 = vmatpush1.msra.mxu0 0.0
  %2088 = vmatprep.subr.mxu0 0.0
  %2089 = vmatpush1.msra.mxu0 0.0
  %2090 = vmatprep.subr.mxu0 0.0
  %2091 = vmatpush1.msra.mxu0 0.0
  %2092 = vmatprep.subr.mxu0 0.0
  %2093 = vmatpush1.msra.mxu0 0.0
  %2094 = vmatprep.subr.mxu0 0.0
  %2095 = vmatpush1.msra.mxu0 0.0
  %2096 = vmatprep.subr.mxu0 0.0
  %2097 = vmatpush1.msra.mxu0 0.0
  %2098 = vmatprep.subr.mxu0 0.0
  %2099 = vmatpush1.msra.mxu0 0.0
  %2100 = vmatprep.subr.mxu0 0.0
  %2101 = vmatpush1.msra.mxu0 0.0
  %2102 = vmatprep.subr.mxu0 0.0
  %2103 = vmatpush1.msra.mxu0 0.0
  %2104 = vmatprep.subr.mxu0 0.0
  %2105 = vmatpush1.msra.mxu0 0.0
  %2106 = vmatprep.subr.mxu0 0.0
  %2107 = vmatpush1.msra.mxu0 0.0
  %2108 = vmatprep.subr.mxu0 0.0
  %2109 = vmatpush1.msra.mxu0 0.0
  %2110 = vmatprep.subr.mxu0 0.0
  %2111 = vmatpush1.msra.mxu0 0.0
  %2112 = vmatprep.subr.mxu0 0.0
  %2113 = vmatpush1.msra.mxu0 0.0
  %2114 = vmatprep.subr.mxu0 0.0
  %2115 = vmatpush1.msra.mxu0 0.0
  %2116 = vmatprep.subr.mxu0 0.0
  %2117 = vmatpush1.msra.mxu0 0.0
  %2118 = vmatprep.subr.mxu0 0.0
  %2119 = vmatpush1.msra.mxu0 0.0
  %2120 = vmatprep.mubr.f32.mxu0 0.0
  %2121 = vmatmul.mubr.f32.gmra.mrb[0].mxu0 %v2048
  %v2122 = vpop.f32.mrb[0].mxu0
  %v2123 = vadd.f32 0.0, %v2122
  %v2124 = vpop.f32.mrb[0].mxu0
  %2125 = vmatprep.mubr.f32.mxu0 0.0
  %2126 = vmatmul.mubr.f32.gmra.mrb[0].mxu0 %v2050
  %v2127 = vpop.f32.mrb[0].mxu0
  %v2128 = vadd.f32 0.0, %v2127
  %v2129 = vpop.f32.mrb[0].mxu0
  %2130 = vmatprep.mubr.f32.mxu0 0.0
  %2131 = vmatmul.mubr.f32.gmra.mrb[0].mxu0 %v2052
  %v2132 = vpop.f32.mrb[0].mxu0
  %v2133 = vadd.f32 0.0, %v2132
  %v2134 = vpop.f32.mrb[0].mxu0
  %2135 = vmatprep.mubr.f32.mxu0 0.0
  %2136 = vmatmul.mubr.f32.gmra.mrb[0].mxu0 %v2054
  %v2137 = vpop.f32.mrb[0].mxu0
  %v2138 = vadd.f32 0.0, %v2137
  %v2139 = vpop.f32.mrb[0].mxu0
  %2140 = vdwg.mxu0
  %v2141 = vadd.f32 %v783, %v2123
  %v2142 = vadd.f32 %v788, %v2128
  %v2143 = vadd.f32 %v823, %v2133
  %v2144 = vadd.f32 %v828, %v2138
  %v2145 = vmul.f32 %v2141, 0.5
  %v2146 = vmul.f32 %v2142, 0.5
  %v2147 = vmul.f32 %v2143, 0.5
  %v2148 = vmul.f32 %v2144, 0.5
  %v2149 = vtanh.pop %v2145
  %v2150 = vtanh.pop %v2146
  %v2151 = vtanh.pop %v2147
  %v2152 = vtanh.pop %v2148
  %v2153 = vmul.f32 %v2149, 0.5
  %v2154 = vmul.f32 %v2150, 0.5
  %v2155 = vmul.f32 %v2151, 0.5
  %v2156 = vmul.f32 %v2152, 0.5
  %v2157 = vadd.f32 %v2153, 0.5
  %v2158 = vadd.f32 %v2154, 0.5
  %v2159 = vadd.f32 %v2155, 0.5
  %v2160 = vadd.f32 %v2156, 0.5
  %v2161 = vtanh.pop %v2141
  %v2162 = vtanh.pop %v2142
  %v2163 = vtanh.pop %v2143
  %v2164 = vtanh.pop %v2144
  %v2165 = vmul.f32 %v2157, %v1799
  %v2166 = vmul.f32 %v2158, %v1800
  %v2167 = vmul.f32 %v2159, %v1801
  %v2168 = vmul.f32 %v2160, %v1802
  %2173 = vrot.lane.b32.xlu0 %v2161, 64
  %v2174 = vpop.permute.xlu0 %2173
  %2175 = vrot.lane.b32.xlu0 %v2162, 64
  %v2176 = vpop.permute.xlu0 %2175
  %2177 = vrot.lane.b32.xlu0 %v2163, 64
  %v2178 = vpop.permute.xlu0 %2177
  %2179 = vrot.lane.b32.xlu0 %v2164, 64
  %v2180 = vpop.permute.xlu0 %2179
  %v2185 = vmul.f32 %v2157, %v2174
  %v2186 = vmul.f32 %v2158, %v2176
  %v2187 = vmul.f32 %v2159, %v2178
  %v2188 = vmul.f32 %v2160, %v2180
  %2193 = vrot.lane.b32.xlu0 %v2185, 32
  %v2194 = vpop.permute.xlu0 %2193
  %2195 = vrot.lane.b32.xlu0 %v2186, 32
  %v2196 = vpop.permute.xlu0 %2195
  %2197 = vrot.lane.b32.xlu0 %v2187, 32
  %v2198 = vpop.permute.xlu0 %2197
  %2199 = vrot.lane.b32.xlu0 %v2188, 32
  %v2200 = vpop.permute.xlu0 %2199
  %v2205 = vadd.f32 %v2165, %v2194
  %v2206 = vadd.f32 %v2166, %v2196
  %v2207 = vadd.f32 %v2167, %v2198
  %v2208 = vadd.f32 %v2168, %v2200
  %v2209 = vtanh.pop %v2205
  %v2210 = vtanh.pop %v2206
  %v2211 = vtanh.pop %v2207
  %v2212 = vtanh.pop %v2208
  %2217 = vrot.lane.b32.xlu0 %v2209, 64
  %v2218 = vpop.permute.xlu0 %2217
  %2219 = vrot.lane.b32.xlu0 %v2210, 64
  %v2220 = vpop.permute.xlu0 %2219
  %2221 = vrot.lane.b32.xlu0 %v2211, 64
  %v2222 = vpop.permute.xlu0 %2221
  %2223 = vrot.lane.b32.xlu0 %v2212, 64
  %v2224 = vpop.permute.xlu0 %2223
  %v2229 = vmul.f32 %v2157, %v2218
  %v2230 = vmul.f32 %v2158, %v2220
  %v2231 = vmul.f32 %v2159, %v2222
  %v2232 = vmul.f32 %v2160, %v2224
  %2237 = vrot.lane.b32.xlu0 %v2229, 32
  %v2238 = vpop.permute.xlu0 %2237
  %2239 = vrot.lane.b32.xlu0 %v2230, 32
  %v2240 = vpop.permute.xlu0 %2239
  %2241 = vrot.lane.b32.xlu0 %v2231, 32
  %v2242 = vpop.permute.xlu0 %2241
  %2243 = vrot.lane.b32.xlu0 %v2232, 32
  %v2244 = vpop.permute.xlu0 %2243
  %2253 = vrot.lane.b32.xlu0 %v2044, 64
  %v2254 = vpop.permute.xlu0 %2253
  %2255 = vrot.lane.b32.xlu0 %v2045, 64
  %v2256 = vpop.permute.xlu0 %2255
  %2257 = vrot.lane.b32.xlu0 %v2046, 64
  %v2258 = vpop.permute.xlu0 %2257
  %2259 = vrot.lane.b32.xlu0 %v2047, 64
  %v2260 = vpop.permute.xlu0 %2259
  %v2265 = vsel %vm417, %v2238, %v2254
  %v2266 = vsel %vm417, %v2240, %v2256
  %v2267 = vsel %vm417, %v2242, %v2258
  %v2268 = vsel %vm417, %v2244, %v2260
  %v2270 = vsel %vm1050, %v2265, 0
  %v2273 = vsel %vm1050, %v2266, 0
  %v2276 = vsel %vm1050, %v2267, 0
  %v2279 = vsel %vm1050, %v2268, 0
  %2281 = vmatprep.subr.mxu0 0.0
  %2282 = vmatpush1.msra.mxu0 %v835
  %2283 = vmatprep.subr.mxu0 0.0
  %2284 = vmatpush1.msra.mxu0 %v836
  %2285 = vmatprep.subr.mxu0 0.0
  %2286 = vmatpush1.msra.mxu0 %v837
  %2287 = vmatprep.subr.mxu0 0.0
  %2288 = vmatpush1.msra.mxu0 %v838
  %2289 = vmatprep.subr.mxu0 0.0
  %2290 = vmatpush1.msra.mxu0 %v839
  %2291 = vmatprep.subr.mxu0 0.0
  %2292 = vmatpush1.msra.mxu0 %v840
  %2293 = vmatprep.subr.mxu0 0.0
  %2294 = vmatpush1.msra.mxu0 %v841
  %2295 = vmatprep.subr.mxu0 0.0
  %2296 = vmatpush1.msra.mxu0 %v842
  %2297 = vmatprep.subr.mxu0 0.0
  %2298 = vmatpush1.msra.mxu0 0.0
  %2299 = vmatprep.subr.mxu0 0.0
  %2300 = vmatpush1.msra.mxu0 0.0
  %2301 = vmatprep.subr.mxu0 0.0
  %2302 = vmatpush1.msra.mxu0 0.0
  %2303 = vmatprep.subr.mxu0 0.0
  %2304 = vmatpush1.msra.mxu0 0.0
  %2305 = vmatprep.subr.mxu0 0.0
  %2306 = vmatpush1.msra.mxu0 0.0
  %2307 = vmatprep.subr.mxu0 0.0
  %2308 = vmatpush1.msra.mxu0 0.0
  %2309 = vmatprep.subr.mxu0 0.0
  %2310 = vmatpush1.msra.mxu0 0.0
  %2311 = vmatprep.subr.mxu0 0.0
  %2312 = vmatpush1.msra.mxu0 0.0
  %2313 = vmatprep.subr.mxu0 0.0
  %2314 = vmatpush1.msra.mxu0 0.0
  %2315 = vmatprep.subr.mxu0 0.0
  %2316 = vmatpush1.msra.mxu0 0.0
  %2317 = vmatprep.subr.mxu0 0.0
  %2318 = vmatpush1.msra.mxu0 0.0
  %2319 = vmatprep.subr.mxu0 0.0
  %2320 = vmatpush1.msra.mxu0 0.0
  %2321 = vmatprep.subr.mxu0 0.0
  %2322 = vmatpush1.msra.mxu0 0.0
  %2323 = vmatprep.subr.mxu0 0.0
  %2324 = vmatpush1.msra.mxu0 0.0
  %2325 = vmatprep.subr.mxu0 0.0
  %2326 = vmatpush1.msra.mxu0 0.0
  %2327 = vmatprep.subr.mxu0 0.0
  %2328 = vmatpush1.msra.mxu0 0.0
  %2329 = vmatprep.subr.mxu0 0.0
  %2330 = vmatpush1.msra.mxu0 0.0
  %2331 = vmatprep.subr.mxu0 0.0
  %2332 = vmatpush1.msra.mxu0 0.0
  %2333 = vmatprep.subr.mxu0 0.0
  %2334 = vmatpush1.msra.mxu0 0.0
  %2335 = vmatprep.subr.mxu0 0.0
  %2336 = vmatpush1.msra.mxu0 0.0
  %2337 = vmatprep.subr.mxu0 0.0
  %2338 = vmatpush1.msra.mxu0 0.0
  %2339 = vmatprep.subr.mxu0 0.0
  %2340 = vmatpush1.msra.mxu0 0.0
  %2341 = vmatprep.subr.mxu0 0.0
  %2342 = vmatpush1.msra.mxu0 0.0
  %2343 = vmatprep.subr.mxu0 0.0
  %2344 = vmatpush1.msra.mxu0 0.0
  %2345 = vmatprep.mubr.f32.mxu0 0.0
  %2346 = vmatmul.mubr.f32.gmra.mrb[0].mxu0 %v2270
  %v2347 = vpop.f32.mrb[0].mxu0
  %v2348 = vadd.f32 %v1048, %v2347
  %v2349 = vpop.f32.mrb[0].mxu0
  %2350 = vmatprep.mubr.f32.mxu0 0.0
  %2351 = vmatmul.mubr.f32.gmra.mrb[0].mxu0 %v2273
  %v2352 = vpop.f32.mrb[0].mxu0
  %v2353 = vadd.f32 %v1048, %v2352
  %v2354 = vpop.f32.mrb[0].mxu0
  %2355 = vmatprep.mubr.f32.mxu0 0.0
  %2356 = vmatmul.mubr.f32.gmra.mrb[0].mxu0 %v2276
  %v2357 = vpop.f32.mrb[0].mxu0
  %v2358 = vadd.f32 %v1048, %v2357
  %v2359 = vpop.f32.mrb[0].mxu0
  %2360 = vmatprep.mubr.f32.mxu0 0.0
  %2361 = vmatmul.mubr.f32.gmra.mrb[0].mxu0 %v2279
  %v2362 = vpop.f32.mrb[0].mxu0
  %v2363 = vadd.f32 %v1048, %v2362
  %v2364 = vpop.f32.mrb[0].mxu0
  %2365 = vdwg.mxu0
  %v2366 = vmul.f32 %v2348, 0.5
  %v2367 = vmul.f32 %v2353, 0.5
  %v2368 = vmul.f32 %v2358, 0.5
  %v2369 = vmul.f32 %v2363, 0.5
  %v2370 = vtanh.pop %v2366
  %v2371 = vtanh.pop %v2367
  %v2372 = vtanh.pop %v2368
  %v2373 = vtanh.pop %v2369
  %v2374 = vmul.f32 %v2370, 0.5
  %v2375 = vmul.f32 %v2371, 0.5
  %v2376 = vmul.f32 %v2372, 0.5
  %v2377 = vmul.f32 %v2373, 0.5
  %v2378 = vadd.f32 %v2374, 0.5
  %v2379 = vadd.f32 %v2375, 0.5
  %v2380 = vadd.f32 %v2376, 0.5
  %v2381 = vadd.f32 %v2377, 0.5
  %v2382 = vtanh.pop %v2348
  %v2383 = vtanh.pop %v2353
  %v2384 = vtanh.pop %v2358
  %v2385 = vtanh.pop %v2363
  %v2386 = vmul.f32 %v2378, %v2020
  %v2387 = vmul.f32 %v2379, %v2021
  %v2388 = vmul.f32 %v2380, %v2022
  %v2389 = vmul.f32 %v2381, %v2023
  %2394 = vrot.lane.b32.xlu0 %v2382, 64
  %v2395 = vpop.permute.xlu0 %2394
  %2396 = vrot.lane.b32.xlu0 %v2383, 64
  %v2397 = vpop.permute.xlu0 %2396
  %2398 = vrot.lane.b32.xlu0 %v2384, 64
  %v2399 = vpop.permute.xlu0 %2398
  %2400 = vrot.lane.b32.xlu0 %v2385, 64
  %v2401 = vpop.permute.xlu0 %2400
  %v2406 = vmul.f32 %v2378, %v2395
  %v2407 = vmul.f32 %v2379, %v2397
  %v2408 = vmul.f32 %v2380, %v2399
  %v2409 = vmul.f32 %v2381, %v2401
  %2414 = vrot.lane.b32.xlu0 %v2406, 32
  %v2415 = vpop.permute.xlu0 %2414
  %2416 = vrot.lane.b32.xlu0 %v2407, 32
  %v2417 = vpop.permute.xlu0 %2416
  %2418 = vrot.lane.b32.xlu0 %v2408, 32
  %v2419 = vpop.permute.xlu0 %2418
  %2420 = vrot.lane.b32.xlu0 %v2409, 32
  %v2421 = vpop.permute.xlu0 %2420
  %v2426 = vadd.f32 %v2386, %v2415
  %v2427 = vadd.f32 %v2387, %v2417
  %v2428 = vadd.f32 %v2388, %v2419
  %v2429 = vadd.f32 %v2389, %v2421
  %v2430 = vtanh.pop %v2426
  %v2431 = vtanh.pop %v2427
  %v2432 = vtanh.pop %v2428
  %v2433 = vtanh.pop %v2429
  %2438 = vrot.lane.b32.xlu0 %v2430, 64
  %v2439 = vpop.permute.xlu0 %2438
  %2440 = vrot.lane.b32.xlu0 %v2431, 64
  %v2441 = vpop.permute.xlu0 %2440
  %2442 = vrot.lane.b32.xlu0 %v2432, 64
  %v2443 = vpop.permute.xlu0 %2442
  %2444 = vrot.lane.b32.xlu0 %v2433, 64
  %v2445 = vpop.permute.xlu0 %2444
  %v2450 = vmul.f32 %v2378, %v2439
  %v2451 = vmul.f32 %v2379, %v2441
  %v2452 = vmul.f32 %v2380, %v2443
  %v2453 = vmul.f32 %v2381, %v2445
  %v2454 = vld [vmem:[%s11] sm:$0xff]
  %v2455 = vld [vmem:[%s11 + $0x8] sm:$0xff]
  %v2456 = vld [vmem:[%s11 + $0x10] sm:$0xff]
  %v2457 = vld [vmem:[%s11 + $0x18] sm:$0xff]
  %v2458 = vld [vmem:[%s12] sm:$0x1]
  %v2460 = vlaneseq
  %v2461 = vshrl.u32 %v2460, 7
  %v2462 = vsub.s32 0, %v2461
  %v2463 = vrot.slane %v2458, %v2462
  %2469 = vrot.lane.b32.xlu0 %v2450, 32
  %v2470 = vpop.permute.xlu0 %2469
  %2471 = vrot.lane.b32.xlu0 %v2451, 32
  %v2472 = vpop.permute.xlu0 %2471
  %2473 = vrot.lane.b32.xlu0 %v2452, 32
  %v2474 = vpop.permute.xlu0 %2473
  %2475 = vrot.lane.b32.xlu0 %v2453, 32
  %v2476 = vpop.permute.xlu0 %2475
  %v2477 = vsel %vm417, %v2470, 0
  %v2479 = vsel %vm417, %v2472, 0
  %v2481 = vsel %vm417, %v2474, 0
  %v2483 = vsel %vm417, %v2476, 0
  %2485 = vmatprep.subr.mxu0 0.0
  %2486 = vmatpush1.msra.mxu0 %v2454
  %2487 = vmatprep.subr.mxu0 0.0
  %2488 = vmatpush1.msra.mxu0 %v2455
  %2489 = vmatprep.subr.mxu0 0.0
  %2490 = vmatpush1.msra.mxu0 %v2456
  %2491 = vmatprep.subr.mxu0 0.0
  %2492 = vmatpush1.msra.mxu0 %v2457
  %2493 = vmatprep.subr.mxu0 0.0
  %2494 = vmatpush1.msra.mxu0 0.0
  %2495 = vmatprep.subr.mxu0 0.0
  %2496 = vmatpush1.msra.mxu0 0.0
  %2497 = vmatprep.subr.mxu0 0.0
  %2498 = vmatpush1.msra.mxu0 0.0
  %2499 = vmatprep.subr.mxu0 0.0
  %2500 = vmatpush1.msra.mxu0 0.0
  %2501 = vmatprep.subr.mxu0 0.0
  %2502 = vmatpush1.msra.mxu0 0.0
  %2503 = vmatprep.subr.mxu0 0.0
  %2504 = vmatpush1.msra.mxu0 0.0
  %2505 = vmatprep.subr.mxu0 0.0
  %2506 = vmatpush1.msra.mxu0 0.0
  %2507 = vmatprep.subr.mxu0 0.0
  %2508 = vmatpush1.msra.mxu0 0.0
  %2509 = vmatprep.subr.mxu0 0.0
  %2510 = vmatpush1.msra.mxu0 0.0
  %2511 = vmatprep.subr.mxu0 0.0
  %2512 = vmatpush1.msra.mxu0 0.0
  %2513 = vmatprep.subr.mxu0 0.0
  %2514 = vmatpush1.msra.mxu0 0.0
  %2515 = vmatprep.subr.mxu0 0.0
  %2516 = vmatpush1.msra.mxu0 0.0
  %2517 = vmatprep.subr.mxu0 0.0
  %2518 = vmatpush1.msra.mxu0 0.0
  %2519 = vmatprep.subr.mxu0 0.0
  %2520 = vmatpush1.msra.mxu0 0.0
  %2521 = vmatprep.subr.mxu0 0.0
  %2522 = vmatpush1.msra.mxu0 0.0
  %2523 = vmatprep.subr.mxu0 0.0
  %2524 = vmatpush1.msra.mxu0 0.0
  %2525 = vmatprep.subr.mxu0 0.0
  %2526 = vmatpush1.msra.mxu0 0.0
  %2527 = vmatprep.subr.mxu0 0.0
  %2528 = vmatpush1.msra.mxu0 0.0
  %2529 = vmatprep.subr.mxu0 0.0
  %2530 = vmatpush1.msra.mxu0 0.0
  %2531 = vmatprep.subr.mxu0 0.0
  %2532 = vmatpush1.msra.mxu0 0.0
  %2533 = vmatprep.subr.mxu0 0.0
  %2534 = vmatpush1.msra.mxu0 0.0
  %2535 = vmatprep.subr.mxu0 0.0
  %2536 = vmatpush1.msra.mxu0 0.0
  %2537 = vmatprep.subr.mxu0 0.0
  %2538 = vmatpush1.msra.mxu0 0.0
  %2539 = vmatprep.subr.mxu0 0.0
  %2540 = vmatpush1.msra.mxu0 0.0
  %2541 = vmatprep.subr.mxu0 0.0
  %2542 = vmatpush1.msra.mxu0 0.0
  %2543 = vmatprep.subr.mxu0 0.0
  %2544 = vmatpush1.msra.mxu0 0.0
  %2545 = vmatprep.subr.mxu0 0.0
  %2546 = vmatpush1.msra.mxu0 0.0
  %2547 = vmatprep.subr.mxu0 0.0
  %2548 = vmatpush1.msra.mxu0 0.0
  %2549 = vmatprep.mubr.f32.mxu0 0.0
  %2550 = vmatmul.mubr.f32.gmra.mrb[0].mxu0 %v2477
  %v2551 = vpop.f32.mrb[0].mxu0
  %v2552 = vadd.f32 %v2463, %v2551
  %v2553 = vpop.f32.mrb[0].mxu0
  %2554 = vmatprep.mubr.f32.mxu0 0.0
  %2555 = vmatmul.mubr.f32.gmra.mrb[0].mxu0 %v2479
  %v2556 = vpop.f32.mrb[0].mxu0
  %v2557 = vadd.f32 %v2463, %v2556
  %v2558 = vpop.f32.mrb[0].mxu0
  %2559 = vmatprep.mubr.f32.mxu0 0.0
  %2560 = vmatmul.mubr.f32.gmra.mrb[0].mxu0 %v2481
  %v2561 = vpop.f32.mrb[0].mxu0
  %v2562 = vadd.f32 %v2463, %v2561
  %v2563 = vpop.f32.mrb[0].mxu0
  %2564 = vmatprep.mubr.f32.mxu0 0.0
  %2565 = vmatmul.mubr.f32.gmra.mrb[0].mxu0 %v2483
  %v2566 = vpop.f32.mrb[0].mxu0
  %v2567 = vadd.f32 %v2463, %v2566
  %v2568 = vpop.f32.mrb[0].mxu0
  %2569 = vdwg.mxu0
  %v2570 = vmax.f32 %v2552, 0.0
  %v2571 = vmax.f32 %v2557, 0.0
  %v2572 = vmax.f32 %v2562, 0.0
  %v2573 = vmax.f32 %v2567, 0.0
  %v2574 = vld [vmem:[%s13] sm:$0xff]
  %v2575 = vld [vmem:[%s13 + $0x8] sm:$0xff]
  %v2576 = vld [vmem:[%s13 + $0x10] sm:$0xff]
  %v2577 = vld [vmem:[%s13 + $0x18] sm:$0xff]
  %v2578 = vld [vmem:[%s14] sm:$0x1]
  %v2580 = vlaneseq
  %v2581 = vshrl.u32 %v2580, 7
  %v2582 = vsub.s32 0, %v2581
  %v2583 = vrot.slane %v2578, %v2582
  %v2586 = vsel %vm417, %v2570, 0
  %v2589 = vsel %vm417, %v2571, 0
  %v2592 = vsel %vm417, %v2572, 0
  %v2595 = vsel %vm417, %v2573, 0
  %2597 = vmatprep.subr.mxu0 0.0
  %2598 = vmatpush1.msra.mxu0 %v2574
  %2599 = vmatprep.subr.mxu0 0.0
  %2600 = vmatpush1.msra.mxu0 %v2575
  %2601 = vmatprep.subr.mxu0 0.0
  %2602 = vmatpush1.msra.mxu0 %v2576
  %2603 = vmatprep.subr.mxu0 0.0
  %2604 = vmatpush1.msra.mxu0 %v2577
  %2605 = vmatprep.subr.mxu0 0.0
  %2606 = vmatpush1.msra.mxu0 0.0
  %2607 = vmatprep.subr.mxu0 0.0
  %2608 = vmatpush1.msra.mxu0 0.0
  %2609 = vmatprep.subr.mxu0 0.0
  %2610 = vmatpush1.msra.mxu0 0.0
  %2611 = vmatprep.subr.mxu0 0.0
  %2612 = vmatpush1.msra.mxu0 0.0
  %2613 = vmatprep.subr.mxu0 0.0
  %2614 = vmatpush1.msra.mxu0 0.0
  %2615 = vmatprep.subr.mxu0 0.0
  %2616 = vmatpush1.msra.mxu0 0.0
  %2617 = vmatprep.subr.mxu0 0.0
  %2618 = vmatpush1.msra.mxu0 0.0
  %2619 = vmatprep.subr.mxu0 0.0
  %2620 = vmatpush1.msra.mxu0 0.0
  %2621 = vmatprep.subr.mxu0 0.0
  %2622 = vmatpush1.msra.mxu0 0.0
  %2623 = vmatprep.subr.mxu0 0.0
  %2624 = vmatpush1.msra.mxu0 0.0
  %2625 = vmatprep.subr.mxu0 0.0
  %2626 = vmatpush1.msra.mxu0 0.0
  %2627 = vmatprep.subr.mxu0 0.0
  %2628 = vmatpush1.msra.mxu0 0.0
  %2629 = vmatprep.subr.mxu0 0.0
  %2630 = vmatpush1.msra.mxu0 0.0
  %2631 = vmatprep.subr.mxu0 0.0
  %2632 = vmatpush1.msra.mxu0 0.0
  %2633 = vmatprep.subr.mxu0 0.0
  %2634 = vmatpush1.msra.mxu0 0.0
  %2635 = vmatprep.subr.mxu0 0.0
  %2636 = vmatpush1.msra.mxu0 0.0
  %2637 = vmatprep.subr.mxu0 0.0
  %2638 = vmatpush1.msra.mxu0 0.0
  %2639 = vmatprep.subr.mxu0 0.0
  %2640 = vmatpush1.msra.mxu0 0.0
  %2641 = vmatprep.subr.mxu0 0.0
  %2642 = vmatpush1.msra.mxu0 0.0
  %2643 = vmatprep.subr.mxu0 0.0
  %2644 = vmatpush1.msra.mxu0 0.0
  %2645 = vmatprep.subr.mxu0 0.0
  %2646 = vmatpush1.msra.mxu0 0.0
  %2647 = vmatprep.subr.mxu0 0.0
  %2648 = vmatpush1.msra.mxu0 0.0
  %2649 = vmatprep.subr.mxu0 0.0
  %2650 = vmatpush1.msra.mxu0 0.0
  %2651 = vmatprep.subr.mxu0 0.0
  %2652 = vmatpush1.msra.mxu0 0.0
  %2653 = vmatprep.subr.mxu0 0.0
  %2654 = vmatpush1.msra.mxu0 0.0
  %2655 = vmatprep.subr.mxu0 0.0
  %2656 = vmatpush1.msra.mxu0 0.0
  %2657 = vmatprep.subr.mxu0 0.0
  %2658 = vmatpush1.msra.mxu0 0.0
  %2659 = vmatprep.subr.mxu0 0.0
  %2660 = vmatpush1.msra.mxu0 0.0
  %2661 = vmatprep.mubr.f32.mxu0 0.0
  %2662 = vmatmul.mubr.f32.gmra.mrb[0].mxu0 %v2586
  %v2663 = vpop.f32.mrb[0].mxu0
  %v2664 = vadd.f32 %v2583, %v2663
  %v2665 = vpop.f32.mrb[0].mxu0
  %2666 = vmatprep.mubr.f32.mxu0 0.0
  %2667 = vmatmul.mubr.f32.gmra.mrb[0].mxu0 %v2589
  %v2668 = vpop.f32.mrb[0].mxu0
  %v2669 = vadd.f32 %v2583, %v2668
  %v2670 = vpop.f32.mrb[0].mxu0
  %2671 = vmatprep.mubr.f32.mxu0 0.0
  %2672 = vmatmul.mubr.f32.gmra.mrb[0].mxu0 %v2592
  %v2673 = vpop.f32.mrb[0].mxu0
  %v2674 = vadd.f32 %v2583, %v2673
  %v2675 = vpop.f32.mrb[0].mxu0
  %2676 = vmatprep.mubr.f32.mxu0 0.0
  %2677 = vmatmul.mubr.f32.gmra.mrb[0].mxu0 %v2595
  %v2678 = vpop.f32.mrb[0].mxu0
  %v2679 = vadd.f32 %v2583, %v2678
  %v2680 = vpop.f32.mrb[0].mxu0
  %2681 = vdwg.mxu0
  %vm2682 = vcmask 48128
  %2683 = vst.msk [vmem:[%s15] sm:$0xff] %vm2682, %v2664
  %2684 = vst.msk [vmem:[%s15 + $0x8] sm:$0xff] %vm2682, %v2669
  %2685 = vst.msk [vmem:[%s15 + $0x10] sm:$0xff] %vm2682, %v2674
  %2686 = vst.msk [vmem:[%s15 + $0x18] sm:$0xff] %vm2682, %v2679
  // Predicated region
  $region62: #{point_mlp_nframes_forward.1} parent=0 // pred_check
    _
  $region63: #{point_mlp_nframes_forward.1} parent=0 // pred_check_branch
    %2688 = sbr.rel (0) target = $region65
  $region64: #{point_mlp_nframes_forward.1} parent=0 // pred_region
    _
  $region65: #{point_mlp_nframes_forward.1} parent=0 // pred_fallthru
    _
  // Predicated region
  $region66: #{point_mlp_nframes_forward.1} parent=0 // pred_check
    _
  $region67: #{point_mlp_nframes_forward.1} parent=0 // pred_check_branch
    %2690 = sbr.rel (0) target = $region69
  $region68: #{point_mlp_nframes_forward.1} parent=0 // pred_region
    _
  $region69: #{point_mlp_nframes_forward.1} parent=0 // pred_fallthru
    _

</llo_original>
